<compile_context>
chip_gen: v7x
topology: tpu7x:2x2x1
jax: 0.10.0
libtpu: 0.0.40
codegen_flags: <defaults>
</compile_context>

<pallas_src>
import numpy as np
import jax
import jax.numpy as jnp
from jax.experimental import pallas as pl
from jax.experimental.pallas import tpu as pltpu

NEG_SLOPE = 0.4
# hparams.upsample_size (kernel sizes); stride = (1, s[0] // 2)  -> 2x per layer
UPSAMPLE_SIZE = [(4, 4), (4, 4)]


def _cdiv(a, b):
    return -(-a // b)


def _phase_lengths(w_total, p):
    """Number of columns w in [0, w_total) with w % p == i, for each phase i."""
    return [_cdiv(max(w_total - i, 0), p) for i in range(p)]


def _plan_chain(h_in, w_in, layers):
    """Static polyphase plan for a chain of ConvTranspose2d(1,1,(KH,KW),stride=(1,sw)).

    The activation after layer l is represented as P_l = prod(sw) phase planes;
    plane i holds columns {w : w % P_l == i}.  For each layer the plan lists,
    per output phase s, the taps (kh, kw, in_phase, q_offset) such that
        out_s[ho, r] = sum_taps  w[kh, kw] * in_{in_phase}[ho - kh, r + q_offset]
    where reads outside the logical activation contribute zero (handled by the
    zero halos recorded in the plan).  Everything here is trace-time Python.
    """
    plan = []
    p_in, w_a, h_cur, q_in = 1, w_in, h_in, [w_in]
    n = len(layers)
    for li, (kh_sz, kw_sz, sw) in enumerate(layers):
        p_out = p_in * sw
        w_out = (w_a - 1) * sw + kw_sz
        h_out = h_cur + kh_sz - 1
        r_out = _phase_lengths(w_out, p_out)
        taps = []
        for s in range(p_out):
            lst = []
            for kh in range(kh_sz):
                for kw in range(kw_sz):
                    if (s - kw) % sw != 0:
                        continue
                    d = (s - kw) // sw              # exact (divisible)
                    lst.append((kh, kw, d % p_in, d // p_in))
            taps.append(lst)
        # Last layer: pad the *stored* output height to a sublane multiple (8);
        # the wrapper crops the extra (well-defined) rows.
        h_store = _cdiv(h_out, 8) * 8 if li == n - 1 else h_out
        pad_top = kh_sz - 1
        pad_bot = (kh_sz - 1) + (h_store - h_out)
        pad_l = [0] * p_in
        pad_r = [0] * p_in
        for s in range(p_out):
            for (_, _, ip, qo) in taps[s]:
                pad_l[ip] = max(pad_l[ip], -qo)
                pad_r[ip] = max(pad_r[ip], qo + r_out[s] - q_in[ip])
        plan.append(dict(KH=kh_sz, KW=kw_sz, sw=sw, P_in=p_in, P_out=p_out,
                         H_in=h_cur, Q_in=list(q_in), Ho=h_out, Ho_store=h_store,
                         Wo=w_out, R=r_out, taps=taps,
                         pad_top=pad_top, pad_bot=pad_bot,
                         pad_l=pad_l, pad_r=pad_r))
        p_in, w_a, h_cur, q_in = p_out, w_out, h_out, r_out
    return plan


def _make_fused_kernel(plan):
    n_layers = len(plan)
    p_last = plan[-1]['P_out']

    def kernel(*refs):
        pos = 0
        w_refs, b_refs = [], []
        for _ in range(n_layers):
            w_refs.append(refs[pos])
            b_refs.append(refs[pos + 1])
            pos += 2
        x_ref = refs[pos]                       # (Hp, Wp) padded input, batch squeezed
        pos += 1
        out_refs = refs[pos:pos + p_last]       # final phase planes
        pos += p_last
        scratch_refs = refs[pos:]               # intermediate phase planes (VMEM)

        # Hoist every scalar weight / bias out of the MAC loops (one SMEM read each).
        w_vals = [[[w_refs[l][i, j] for j in range(plan[l]['KW'])]
                   for i in range(plan[l]['KH'])] for l in range(n_layers)]
        b_vals = [b_refs[l][0] for l in range(n_layers)]

        def reader(ref_list):
            def read(ip, r0, nr, c0, nc):
                return ref_list[ip][r0:r0 + nr, c0:c0 + nc]
            return read

        read_in = reader([x_ref])               # layer 0 input = padded x (P_in = 1)
        scratch_pos = 0
        for l in range(n_layers):
            lp = plan[l]
            is_last = (l == n_layers - 1)
            if not is_last:
                nxt = plan[l + 1]
                out_scratch = list(scratch_refs[scratch_pos:scratch_pos + lp['P_out']])
                scratch_pos += lp['P_out']
            nrows = lp['Ho_store']
            for s in range(lp['P_out']):
                r_s = lp['R'][s]
                acc = jnp.zeros((nrows, r_s), jnp.float32)
                for (kh, kw, ip, qo) in lp['taps'][s]:
                    r0 = lp['pad_top'] - kh
                    c0 = lp['pad_l'][ip] + qo
                    acc = acc + w_vals[l][kh][kw] * read_in(ip, r0, nrows, c0, r_s)
                acc = acc + b_vals[l]
                acc = jnp.where(acc >= 0, acc, NEG_SLOPE * acc)      # LeakyReLU(0.4)
                if is_last:
                    out_refs[s][...] = acc.astype(out_refs[s].dtype)
                else:
                    scr = out_scratch[s]
                    scr[...] = jnp.zeros(scr.shape, jnp.float32)     # zero the halo
                    r_lo, c_lo = nxt['pad_top'], nxt['pad_l'][s]
                    scr[r_lo:r_lo + lp['Ho'], c_lo:c_lo + r_s] = acc
            if not is_last:
                read_in = reader(out_scratch)

    return kernel


def clari_upsample_conv(c, params, strides):
    """c: (B, 1, H_mel, T) NCHW (f32)  ->  (B, 1, H_out, T_out) f32."""
    assert len(params) == len(strides)
    x = c[:, 0, :, :].astype(jnp.float32)                    # channel dim is always 1
    batch, h_in, w_in = x.shape
    layers = [(int(w.shape[0]), int(w.shape[1]), int(sw))
              for (w, _), sw in zip(params, strides)]
    plan = _plan_chain(int(h_in), int(w_in), layers)
    lp0, lpl = plan[0], plan[-1]

    # Tiny constant zero halo around the raw input (NOT the 2x zero-dilated copy
    # a naive transposed conv would materialise in HBM).
    x_pad = jnp.pad(x, ((0, 0),
                        (lp0['pad_top'], lp0['pad_bot']),
                        (lp0['pad_l'][0], lp0['pad_r'][0])))
    hp, wp = int(x_pad.shape[1]), int(x_pad.shape[2])

    flat_inputs, in_specs = [], []
    for (w_l, b_l) in params:
        flat_inputs += [w_l.astype(jnp.float32), b_l.astype(jnp.float32)]
        in_specs += [pl.BlockSpec(memory_space=pltpu.MemorySpace.SMEM),
                     pl.BlockSpec(memory_space=pltpu.MemorySpace.SMEM)]
    flat_inputs.append(x_pad)
    # TODO(synk): for very long T add a time-tile grid axis with a (KW-1) halo
    # (manual DMA / Element index_map) so per-step blocks stay a few MB in VMEM.
    in_specs.append(pl.BlockSpec((None, hp, wp), lambda b: (b, 0, 0)))

    p_last = lpl['P_out']
    out_shape = tuple(
        jax.ShapeDtypeStruct((batch, lpl['Ho_store'], lpl['R'][s]), jnp.float32)
        for s in range(p_last))
    out_specs = tuple(
        pl.BlockSpec((None, lpl['Ho_store'], lpl['R'][s]), lambda b: (b, 0, 0))
        for s in range(p_last))

    scratch_shapes = []
    for l in range(len(plan) - 1):
        nxt = plan[l + 1]
        for s in range(plan[l]['P_out']):
            scratch_shapes.append(pltpu.VMEM(
                (nxt['pad_top'] + nxt['H_in'] + nxt['pad_bot'],
                 nxt['pad_l'][s] + nxt['Q_in'][s] + nxt['pad_r'][s]),
                jnp.float32))

    outs = pl.pallas_call(
        _make_fused_kernel(plan),
        out_shape=out_shape,
        grid=(batch,),
        in_specs=in_specs,
        out_specs=out_specs,
        scratch_shapes=scratch_shapes,
        compiler_params=pltpu.CompilerParams(
            dimension_semantics=("parallel",)),      # megacore-shard batch on v7x
    )(*flat_inputs)

    # Interleave the P dense phase planes back into natural time order:
    # out[b, h, r*P + s] = outs[s][b, h, r].  Pure layout plumbing, done once.
    r_max = max(lpl['R'])
    padded = [jnp.pad(o, ((0, 0), (0, 0), (0, r_max - o.shape[-1]))) for o in outs]
    stacked = jnp.stack(padded, axis=-1)             # (B, Ho_store, r_max, P)
    y = stacked.reshape(batch, lpl['Ho_store'], r_max * p_last)
    y = y[:, :lpl['Ho'], :lpl['Wo']]                 # crop sublane / phase padding
    return y[:, None, :, :]


def make_layer_params(key, kh, kw):
    """ConvTranspose2d(1,1,(kh,kw)) params with weight_norm applied.

    Module init fills weight with 1/kh and bias with 0; we add a small
    deterministic perturbation so the test is non-degenerate, then apply the
    weight-norm reparametrization  w = g * v / ||v||  (dim=0, g = ||v|| at init).
    """
    v = jnp.full((1, 1, kh, kw), 1.0 / kh, jnp.float32) \
        + 0.05 * jax.random.normal(key, (1, 1, kh, kw), jnp.float32)
    norm = jnp.sqrt(jnp.sum(v * v, axis=(1, 2, 3), keepdims=True))
    g = norm                                   # weight_norm init: g = ||v||
    w_eff = (g * v / norm)[0, 0]               # (kh, kw)
    bias = jnp.zeros((1,), jnp.float32)
    return w_eff, bias


# ------------------------- reference (numpy, scatter form) -------------------------
def ref_convt_leaky(x, w, b, sw):
    B, H, W = x.shape
    KH, KW = w.shape
    Ho, Wo = H + KH - 1, (W - 1) * sw + KW
    out = np.zeros((B, Ho, Wo), np.float32)
    for n in range(B):
        for hi in range(H):
            for wi in range(W):
                out[n, hi:hi + KH, wi * sw:wi * sw + KW] += x[n, hi, wi] * w
    out = out + b
    return np.where(out >= 0, out, NEG_SLOPE * out)


def ref_forward(c, params, strides):
    x = np.asarray(c)[:, 0, :, :]
    for (w, b), sw in zip(params, strides):
        x = ref_convt_leaky(x, np.asarray(w), float(np.asarray(b)[0]), sw)
    return x[:, None, :, :]


if __name__ == "__main__":
    key = jax.random.PRNGKey(0)
    k_in, *k_layers = jax.random.split(key, 1 + len(UPSAMPLE_SIZE))

    B, Cmel, T = 2, 8, 16
    c = jax.random.normal(k_in, (B, 1, Cmel, T), jnp.float32)   # NCHW, C=1

    params, strides = [], []
    for kl, s in zip(k_layers, UPSAMPLE_SIZE):
        params.append(make_layer_params(kl, s[0], s[1]))
        strides.append(s[0] // 2)          # stride = (1, s[0] / 2) in the module

    out = clari_upsample_conv(c, params, strides)
    out = jax.block_until_ready(out)

    ref = ref_forward(np.asarray(c),
                      [(np.asarray(w), np.asarray(b)) for w, b in params],
                      strides)
    np.testing.assert_allclose(np.asarray(out), ref, rtol=1e-5, atol=1e-5)
    print("KERNEL_OK")
</pallas_src>

<mosaic_0001>
module attributes {stable_mosaic.version = 11 : i64} {
  func.func @kernel(%arg0: i32, %arg1: memref<4x4xf32, #tpu.memory_space<smem>>, %arg2: memref<1xf32, #tpu.memory_space<smem>>, %arg3: memref<4x4xf32, #tpu.memory_space<smem>>, %arg4: memref<1xf32, #tpu.memory_space<smem>>, %arg5: memref<1x14x18xf32, #tpu.memory_space<vmem>>, %arg6: memref<1x16x18xf32, #tpu.memory_space<vmem>>, %arg7: memref<1x16x18xf32, #tpu.memory_space<vmem>>, %arg8: memref<1x16x17xf32, #tpu.memory_space<vmem>>, %arg9: memref<1x16x17xf32, #tpu.memory_space<vmem>>, %arg10: memref<19x18xf32, #tpu.memory_space<vmem>>, %arg11: memref<19x18xf32, #tpu.memory_space<vmem>>) attributes {dimension_semantics = [#tpu.dimension_semantics<parallel>], iteration_bounds = array<i64: 2>, scalar_prefetch = 0 : i64, scratch_operands = 2 : i64, tpu.core_type = #tpu.core_type<tc>, window_params = [{transform_indices = @transform_0, window_bounds = array<i64: 4, 4>}, {transform_indices = @transform_1, window_bounds = array<i64: 1>}, {transform_indices = @transform_2, window_bounds = array<i64: 4, 4>}, {transform_indices = @transform_3, window_bounds = array<i64: 1>}, {transform_indices = @transform_4, window_bounds = array<i64: 1, 14, 18>}, {transform_indices = @transform_5, window_bounds = array<i64: 1, 16, 18>}, {transform_indices = @transform_6, window_bounds = array<i64: 1, 16, 18>}, {transform_indices = @transform_7, window_bounds = array<i64: 1, 16, 17>}, {transform_indices = @transform_8, window_bounds = array<i64: 1, 16, 17>}]} {
    %c0 = arith.constant 0 : index
    %c0_0 = arith.constant 0 : index
    %0 = memref.load %arg1[%c0, %c0_0] : memref<4x4xf32, #tpu.memory_space<smem>>
    %c0_1 = arith.constant 0 : index
    %c1 = arith.constant 1 : index
    %1 = memref.load %arg1[%c0_1, %c1] : memref<4x4xf32, #tpu.memory_space<smem>>
    %c0_2 = arith.constant 0 : index
    %c2 = arith.constant 2 : index
    %2 = memref.load %arg1[%c0_2, %c2] : memref<4x4xf32, #tpu.memory_space<smem>>
    %c0_3 = arith.constant 0 : index
    %c3 = arith.constant 3 : index
    %3 = memref.load %arg1[%c0_3, %c3] : memref<4x4xf32, #tpu.memory_space<smem>>
    %c1_4 = arith.constant 1 : index
    %c0_5 = arith.constant 0 : index
    %4 = memref.load %arg1[%c1_4, %c0_5] : memref<4x4xf32, #tpu.memory_space<smem>>
    %c1_6 = arith.constant 1 : index
    %c1_7 = arith.constant 1 : index
    %5 = memref.load %arg1[%c1_6, %c1_7] : memref<4x4xf32, #tpu.memory_space<smem>>
    %c1_8 = arith.constant 1 : index
    %c2_9 = arith.constant 2 : index
    %6 = memref.load %arg1[%c1_8, %c2_9] : memref<4x4xf32, #tpu.memory_space<smem>>
    %c1_10 = arith.constant 1 : index
    %c3_11 = arith.constant 3 : index
    %7 = memref.load %arg1[%c1_10, %c3_11] : memref<4x4xf32, #tpu.memory_space<smem>>
    %c2_12 = arith.constant 2 : index
    %c0_13 = arith.constant 0 : index
    %8 = memref.load %arg1[%c2_12, %c0_13] : memref<4x4xf32, #tpu.memory_space<smem>>
    %c2_14 = arith.constant 2 : index
    %c1_15 = arith.constant 1 : index
    %9 = memref.load %arg1[%c2_14, %c1_15] : memref<4x4xf32, #tpu.memory_space<smem>>
    %c2_16 = arith.constant 2 : index
    %c2_17 = arith.constant 2 : index
    %10 = memref.load %arg1[%c2_16, %c2_17] : memref<4x4xf32, #tpu.memory_space<smem>>
    %c2_18 = arith.constant 2 : index
    %c3_19 = arith.constant 3 : index
    %11 = memref.load %arg1[%c2_18, %c3_19] : memref<4x4xf32, #tpu.memory_space<smem>>
    %c3_20 = arith.constant 3 : index
    %c0_21 = arith.constant 0 : index
    %12 = memref.load %arg1[%c3_20, %c0_21] : memref<4x4xf32, #tpu.memory_space<smem>>
    %c3_22 = arith.constant 3 : index
    %c1_23 = arith.constant 1 : index
    %13 = memref.load %arg1[%c3_22, %c1_23] : memref<4x4xf32, #tpu.memory_space<smem>>
    %c3_24 = arith.constant 3 : index
    %c2_25 = arith.constant 2 : index
    %14 = memref.load %arg1[%c3_24, %c2_25] : memref<4x4xf32, #tpu.memory_space<smem>>
    %c3_26 = arith.constant 3 : index
    %c3_27 = arith.constant 3 : index
    %15 = memref.load %arg1[%c3_26, %c3_27] : memref<4x4xf32, #tpu.memory_space<smem>>
    %c0_28 = arith.constant 0 : index
    %c0_29 = arith.constant 0 : index
    %16 = memref.load %arg3[%c0_28, %c0_29] : memref<4x4xf32, #tpu.memory_space<smem>>
    %c0_30 = arith.constant 0 : index
    %c1_31 = arith.constant 1 : index
    %17 = memref.load %arg3[%c0_30, %c1_31] : memref<4x4xf32, #tpu.memory_space<smem>>
    %c0_32 = arith.constant 0 : index
    %c2_33 = arith.constant 2 : index
    %18 = memref.load %arg3[%c0_32, %c2_33] : memref<4x4xf32, #tpu.memory_space<smem>>
    %c0_34 = arith.constant 0 : index
    %c3_35 = arith.constant 3 : index
    %19 = memref.load %arg3[%c0_34, %c3_35] : memref<4x4xf32, #tpu.memory_space<smem>>
    %c1_36 = arith.constant 1 : index
    %c0_37 = arith.constant 0 : index
    %20 = memref.load %arg3[%c1_36, %c0_37] : memref<4x4xf32, #tpu.memory_space<smem>>
    %c1_38 = arith.constant 1 : index
    %c1_39 = arith.constant 1 : index
    %21 = memref.load %arg3[%c1_38, %c1_39] : memref<4x4xf32, #tpu.memory_space<smem>>
    %c1_40 = arith.constant 1 : index
    %c2_41 = arith.constant 2 : index
    %22 = memref.load %arg3[%c1_40, %c2_41] : memref<4x4xf32, #tpu.memory_space<smem>>
    %c1_42 = arith.constant 1 : index
    %c3_43 = arith.constant 3 : index
    %23 = memref.load %arg3[%c1_42, %c3_43] : memref<4x4xf32, #tpu.memory_space<smem>>
    %c2_44 = arith.constant 2 : index
    %c0_45 = arith.constant 0 : index
    %24 = memref.load %arg3[%c2_44, %c0_45] : memref<4x4xf32, #tpu.memory_space<smem>>
    %c2_46 = arith.constant 2 : index
    %c1_47 = arith.constant 1 : index
    %25 = memref.load %arg3[%c2_46, %c1_47] : memref<4x4xf32, #tpu.memory_space<smem>>
    %c2_48 = arith.constant 2 : index
    %c2_49 = arith.constant 2 : index
    %26 = memref.load %arg3[%c2_48, %c2_49] : memref<4x4xf32, #tpu.memory_space<smem>>
    %c2_50 = arith.constant 2 : index
    %c3_51 = arith.constant 3 : index
    %27 = memref.load %arg3[%c2_50, %c3_51] : memref<4x4xf32, #tpu.memory_space<smem>>
    %c3_52 = arith.constant 3 : index
    %c0_53 = arith.constant 0 : index
    %28 = memref.load %arg3[%c3_52, %c0_53] : memref<4x4xf32, #tpu.memory_space<smem>>
    %c3_54 = arith.constant 3 : index
    %c1_55 = arith.constant 1 : index
    %29 = memref.load %arg3[%c3_54, %c1_55] : memref<4x4xf32, #tpu.memory_space<smem>>
    %c3_56 = arith.constant 3 : index
    %c2_57 = arith.constant 2 : index
    %30 = memref.load %arg3[%c3_56, %c2_57] : memref<4x4xf32, #tpu.memory_space<smem>>
    %c3_58 = arith.constant 3 : index
    %c3_59 = arith.constant 3 : index
    %31 = memref.load %arg3[%c3_58, %c3_59] : memref<4x4xf32, #tpu.memory_space<smem>>
    %c0_60 = arith.constant 0 : index
    %32 = memref.load %arg2[%c0_60] : memref<1xf32, #tpu.memory_space<smem>>
    %c0_61 = arith.constant 0 : index
    %33 = memref.load %arg4[%c0_61] : memref<1xf32, #tpu.memory_space<smem>>
    %cst = arith.constant 0.000000e+00 : f32
    %34 = vector.broadcast %cst : f32 to vector<11x17xf32>
    %c0_62 = arith.constant 0 : index
    %c3_63 = arith.constant 3 : index
    %c1_64 = arith.constant 1 : index
    %35 = vector.load %arg5[%c0_62, %c3_63, %c1_64] : memref<1x14x18xf32, #tpu.memory_space<vmem>>, vector<1x11x17xf32>
    %36 = vector.shape_cast %35 : vector<1x11x17xf32> to vector<11x17xf32>
    %37 = vector.broadcast %0 : f32 to vector<11x17xf32>
    %38 = arith.mulf %37, %36 : vector<11x17xf32>
    %39 = arith.addf %34, %38 : vector<11x17xf32>
    %c0_65 = arith.constant 0 : index
    %c3_66 = arith.constant 3 : index
    %c0_67 = arith.constant 0 : index
    %40 = vector.load %arg5[%c0_65, %c3_66, %c0_67] : memref<1x14x18xf32, #tpu.memory_space<vmem>>, vector<1x11x17xf32>
    %41 = vector.shape_cast %40 : vector<1x11x17xf32> to vector<11x17xf32>
    %42 = vector.broadcast %2 : f32 to vector<11x17xf32>
    %43 = arith.mulf %42, %41 : vector<11x17xf32>
    %44 = arith.addf %39, %43 : vector<11x17xf32>
    %c0_68 = arith.constant 0 : index
    %c2_69 = arith.constant 2 : index
    %c1_70 = arith.constant 1 : index
    %45 = vector.load %arg5[%c0_68, %c2_69, %c1_70] : memref<1x14x18xf32, #tpu.memory_space<vmem>>, vector<1x11x17xf32>
    %46 = vector.shape_cast %45 : vector<1x11x17xf32> to vector<11x17xf32>
    %47 = vector.broadcast %4 : f32 to vector<11x17xf32>
    %48 = arith.mulf %47, %46 : vector<11x17xf32>
    %49 = arith.addf %44, %48 : vector<11x17xf32>
    %c0_71 = arith.constant 0 : index
    %c2_72 = arith.constant 2 : index
    %c0_73 = arith.constant 0 : index
    %50 = vector.load %arg5[%c0_71, %c2_72, %c0_73] : memref<1x14x18xf32, #tpu.memory_space<vmem>>, vector<1x11x17xf32>
    %51 = vector.shape_cast %50 : vector<1x11x17xf32> to vector<11x17xf32>
    %52 = vector.broadcast %6 : f32 to vector<11x17xf32>
    %53 = arith.mulf %52, %51 : vector<11x17xf32>
    %54 = arith.addf %49, %53 : vector<11x17xf32>
    %c0_74 = arith.constant 0 : index
    %c1_75 = arith.constant 1 : index
    %c1_76 = arith.constant 1 : index
    %55 = vector.load %arg5[%c0_74, %c1_75, %c1_76] : memref<1x14x18xf32, #tpu.memory_space<vmem>>, vector<1x11x17xf32>
    %56 = vector.shape_cast %55 : vector<1x11x17xf32> to vector<11x17xf32>
    %57 = vector.broadcast %8 : f32 to vector<11x17xf32>
    %58 = arith.mulf %57, %56 : vector<11x17xf32>
    %59 = arith.addf %54, %58 : vector<11x17xf32>
    %c0_77 = arith.constant 0 : index
    %c1_78 = arith.constant 1 : index
    %c0_79 = arith.constant 0 : index
    %60 = vector.load %arg5[%c0_77, %c1_78, %c0_79] : memref<1x14x18xf32, #tpu.memory_space<vmem>>, vector<1x11x17xf32>
    %61 = vector.shape_cast %60 : vector<1x11x17xf32> to vector<11x17xf32>
    %62 = vector.broadcast %10 : f32 to vector<11x17xf32>
    %63 = arith.mulf %62, %61 : vector<11x17xf32>
    %64 = arith.addf %59, %63 : vector<11x17xf32>
    %c0_80 = arith.constant 0 : index
    %c0_81 = arith.constant 0 : index
    %c1_82 = arith.constant 1 : index
    %65 = vector.load %arg5[%c0_80, %c0_81, %c1_82] : memref<1x14x18xf32, #tpu.memory_space<vmem>>, vector<1x11x17xf32>
    %66 = vector.shape_cast %65 : vector<1x11x17xf32> to vector<11x17xf32>
    %67 = vector.broadcast %12 : f32 to vector<11x17xf32>
    %68 = arith.mulf %67, %66 : vector<11x17xf32>
    %69 = arith.addf %64, %68 : vector<11x17xf32>
    %c0_83 = arith.constant 0 : index
    %c0_84 = arith.constant 0 : index
    %c0_85 = arith.constant 0 : index
    %70 = vector.load %arg5[%c0_83, %c0_84, %c0_85] : memref<1x14x18xf32, #tpu.memory_space<vmem>>, vector<1x11x17xf32>
    %71 = vector.shape_cast %70 : vector<1x11x17xf32> to vector<11x17xf32>
    %72 = vector.broadcast %14 : f32 to vector<11x17xf32>
    %73 = arith.mulf %72, %71 : vector<11x17xf32>
    %74 = arith.addf %69, %73 : vector<11x17xf32>
    %75 = vector.broadcast %32 : f32 to vector<11x17xf32>
    %76 = arith.addf %74, %75 : vector<11x17xf32>
    %cst_86 = arith.constant 0.000000e+00 : f32
    %77 = vector.broadcast %cst_86 : f32 to vector<11x17xf32>
    %78 = arith.cmpf oge, %76, %77 : vector<11x17xf32>
    %cst_87 = arith.constant 4.000000e-01 : f32
    %79 = vector.broadcast %cst_87 : f32 to vector<11x17xf32>
    %80 = arith.mulf %79, %76 : vector<11x17xf32>
    %81 = arith.select %78, %76, %80 : vector<11x17xi1>, vector<11x17xf32>
    %cst_88 = arith.constant 0.000000e+00 : f32
    %82 = vector.broadcast %cst_88 : f32 to vector<19x18xf32>
    %c0_89 = arith.constant 0 : index
    %c0_90 = arith.constant 0 : index
    %83 = vector.load %arg10[%c0_89, %c0_90] : memref<19x18xf32, #tpu.memory_space<vmem>>, vector<19x18xf32>
    tpu.vector_store %arg10[%c0_89, %c0_90], %82 {strides = array<i32>} : memref<19x18xf32, #tpu.memory_space<vmem>>, vector<19x18xf32>,
    %c3_91 = arith.constant 3 : index
    %c0_92 = arith.constant 0 : index
    %84 = vector.load %arg10[%c3_91, %c0_92] : memref<19x18xf32, #tpu.memory_space<vmem>>, vector<11x17xf32>
    tpu.vector_store %arg10[%c3_91, %c0_92], %81 {strides = array<i32>} : memref<19x18xf32, #tpu.memory_space<vmem>>, vector<11x17xf32>,
    %cst_93 = arith.constant 0.000000e+00 : f32
    %85 = vector.broadcast %cst_93 : f32 to vector<11x17xf32>
    %c0_94 = arith.constant 0 : index
    %c3_95 = arith.constant 3 : index
    %c1_96 = arith.constant 1 : index
    %86 = vector.load %arg5[%c0_94, %c3_95, %c1_96] : memref<1x14x18xf32, #tpu.memory_space<vmem>>, vector<1x11x17xf32>
    %87 = vector.shape_cast %86 : vector<1x11x17xf32> to vector<11x17xf32>
    %88 = vector.broadcast %1 : f32 to vector<11x17xf32>
    %89 = arith.mulf %88, %87 : vector<11x17xf32>
    %90 = arith.addf %85, %89 : vector<11x17xf32>
    %c0_97 = arith.constant 0 : index
    %c3_98 = arith.constant 3 : index
    %c0_99 = arith.constant 0 : index
    %91 = vector.load %arg5[%c0_97, %c3_98, %c0_99] : memref<1x14x18xf32, #tpu.memory_space<vmem>>, vector<1x11x17xf32>
    %92 = vector.shape_cast %91 : vector<1x11x17xf32> to vector<11x17xf32>
    %93 = vector.broadcast %3 : f32 to vector<11x17xf32>
    %94 = arith.mulf %93, %92 : vector<11x17xf32>
    %95 = arith.addf %90, %94 : vector<11x17xf32>
    %c0_100 = arith.constant 0 : index
    %c2_101 = arith.constant 2 : index
    %c1_102 = arith.constant 1 : index
    %96 = vector.load %arg5[%c0_100, %c2_101, %c1_102] : memref<1x14x18xf32, #tpu.memory_space<vmem>>, vector<1x11x17xf32>
    %97 = vector.shape_cast %96 : vector<1x11x17xf32> to vector<11x17xf32>
    %98 = vector.broadcast %5 : f32 to vector<11x17xf32>
    %99 = arith.mulf %98, %97 : vector<11x17xf32>
    %100 = arith.addf %95, %99 : vector<11x17xf32>
    %c0_103 = arith.constant 0 : index
    %c2_104 = arith.constant 2 : index
    %c0_105 = arith.constant 0 : index
    %101 = vector.load %arg5[%c0_103, %c2_104, %c0_105] : memref<1x14x18xf32, #tpu.memory_space<vmem>>, vector<1x11x17xf32>
    %102 = vector.shape_cast %101 : vector<1x11x17xf32> to vector<11x17xf32>
    %103 = vector.broadcast %7 : f32 to vector<11x17xf32>
    %104 = arith.mulf %103, %102 : vector<11x17xf32>
    %105 = arith.addf %100, %104 : vector<11x17xf32>
    %c0_106 = arith.constant 0 : index
    %c1_107 = arith.constant 1 : index
    %c1_108 = arith.constant 1 : index
    %106 = vector.load %arg5[%c0_106, %c1_107, %c1_108] : memref<1x14x18xf32, #tpu.memory_space<vmem>>, vector<1x11x17xf32>
    %107 = vector.shape_cast %106 : vector<1x11x17xf32> to vector<11x17xf32>
    %108 = vector.broadcast %9 : f32 to vector<11x17xf32>
    %109 = arith.mulf %108, %107 : vector<11x17xf32>
    %110 = arith.addf %105, %109 : vector<11x17xf32>
    %c0_109 = arith.constant 0 : index
    %c1_110 = arith.constant 1 : index
    %c0_111 = arith.constant 0 : index
    %111 = vector.load %arg5[%c0_109, %c1_110, %c0_111] : memref<1x14x18xf32, #tpu.memory_space<vmem>>, vector<1x11x17xf32>
    %112 = vector.shape_cast %111 : vector<1x11x17xf32> to vector<11x17xf32>
    %113 = vector.broadcast %11 : f32 to vector<11x17xf32>
    %114 = arith.mulf %113, %112 : vector<11x17xf32>
    %115 = arith.addf %110, %114 : vector<11x17xf32>
    %c0_112 = arith.constant 0 : index
    %c0_113 = arith.constant 0 : index
    %c1_114 = arith.constant 1 : index
    %116 = vector.load %arg5[%c0_112, %c0_113, %c1_114] : memref<1x14x18xf32, #tpu.memory_space<vmem>>, vector<1x11x17xf32>
    %117 = vector.shape_cast %116 : vector<1x11x17xf32> to vector<11x17xf32>
    %118 = vector.broadcast %13 : f32 to vector<11x17xf32>
    %119 = arith.mulf %118, %117 : vector<11x17xf32>
    %120 = arith.addf %115, %119 : vector<11x17xf32>
    %c0_115 = arith.constant 0 : index
    %c0_116 = arith.constant 0 : index
    %c0_117 = arith.constant 0 : index
    %121 = vector.load %arg5[%c0_115, %c0_116, %c0_117] : memref<1x14x18xf32, #tpu.memory_space<vmem>>, vector<1x11x17xf32>
    %122 = vector.shape_cast %121 : vector<1x11x17xf32> to vector<11x17xf32>
    %123 = vector.broadcast %15 : f32 to vector<11x17xf32>
    %124 = arith.mulf %123, %122 : vector<11x17xf32>
    %125 = arith.addf %120, %124 : vector<11x17xf32>
    %126 = vector.broadcast %32 : f32 to vector<11x17xf32>
    %127 = arith.addf %125, %126 : vector<11x17xf32>
    %cst_118 = arith.constant 0.000000e+00 : f32
    %128 = vector.broadcast %cst_118 : f32 to vector<11x17xf32>
    %129 = arith.cmpf oge, %127, %128 : vector<11x17xf32>
    %cst_119 = arith.constant 4.000000e-01 : f32
    %130 = vector.broadcast %cst_119 : f32 to vector<11x17xf32>
    %131 = arith.mulf %130, %127 : vector<11x17xf32>
    %132 = arith.select %129, %127, %131 : vector<11x17xi1>, vector<11x17xf32>
    %cst_120 = arith.constant 0.000000e+00 : f32
    %133 = vector.broadcast %cst_120 : f32 to vector<19x18xf32>
    %c0_121 = arith.constant 0 : index
    %c0_122 = arith.constant 0 : index
    %134 = vector.load %arg11[%c0_121, %c0_122] : memref<19x18xf32, #tpu.memory_space<vmem>>, vector<19x18xf32>
    tpu.vector_store %arg11[%c0_121, %c0_122], %133 {strides = array<i32>} : memref<19x18xf32, #tpu.memory_space<vmem>>, vector<19x18xf32>,
    %c3_123 = arith.constant 3 : index
    %c1_124 = arith.constant 1 : index
    %135 = vector.load %arg11[%c3_123, %c1_124] : memref<19x18xf32, #tpu.memory_space<vmem>>, vector<11x17xf32>
    tpu.vector_store %arg11[%c3_123, %c1_124], %132 {strides = array<i32>} : memref<19x18xf32, #tpu.memory_space<vmem>>, vector<11x17xf32>,
    %cst_125 = arith.constant 0.000000e+00 : f32
    %136 = vector.broadcast %cst_125 : f32 to vector<16x18xf32>
    %c3_126 = arith.constant 3 : index
    %c0_127 = arith.constant 0 : index
    %137 = vector.load %arg10[%c3_126, %c0_127] : memref<19x18xf32, #tpu.memory_space<vmem>>, vector<16x18xf32>
    %138 = vector.broadcast %16 : f32 to vector<16x18xf32>
    %139 = arith.mulf %138, %137 : vector<16x18xf32>
    %140 = arith.addf %136, %139 : vector<16x18xf32>
    %c3_128 = arith.constant 3 : index
    %c0_129 = arith.constant 0 : index
    %141 = vector.load %arg11[%c3_128, %c0_129] : memref<19x18xf32, #tpu.memory_space<vmem>>, vector<16x18xf32>
    %142 = vector.broadcast %18 : f32 to vector<16x18xf32>
    %143 = arith.mulf %142, %141 : vector<16x18xf32>
    %144 = arith.addf %140, %143 : vector<16x18xf32>
    %c2_130 = arith.constant 2 : index
    %c0_131 = arith.constant 0 : index
    %145 = vector.load %arg10[%c2_130, %c0_131] : memref<19x18xf32, #tpu.memory_space<vmem>>, vector<16x18xf32>
    %146 = vector.broadcast %20 : f32 to vector<16x18xf32>
    %147 = arith.mulf %146, %145 : vector<16x18xf32>
    %148 = arith.addf %144, %147 : vector<16x18xf32>
    %c2_132 = arith.constant 2 : index
    %c0_133 = arith.constant 0 : index
    %149 = vector.load %arg11[%c2_132, %c0_133] : memref<19x18xf32, #tpu.memory_space<vmem>>, vector<16x18xf32>
    %150 = vector.broadcast %22 : f32 to vector<16x18xf32>
    %151 = arith.mulf %150, %149 : vector<16x18xf32>
    %152 = arith.addf %148, %151 : vector<16x18xf32>
    %c1_134 = arith.constant 1 : index
    %c0_135 = arith.constant 0 : index
    %153 = vector.load %arg10[%c1_134, %c0_135] : memref<19x18xf32, #tpu.memory_space<vmem>>, vector<16x18xf32>
    %154 = vector.broadcast %24 : f32 to vector<16x18xf32>
    %155 = arith.mulf %154, %153 : vector<16x18xf32>
    %156 = arith.addf %152, %155 : vector<16x18xf32>
    %c1_136 = arith.constant 1 : index
    %c0_137 = arith.constant 0 : index
    %157 = vector.load %arg11[%c1_136, %c0_137] : memref<19x18xf32, #tpu.memory_space<vmem>>, vector<16x18xf32>
    %158 = vector.broadcast %26 : f32 to vector<16x18xf32>
    %159 = arith.mulf %158, %157 : vector<16x18xf32>
    %160 = arith.addf %156, %159 : vector<16x18xf32>
    %c0_138 = arith.constant 0 : index
    %c0_139 = arith.constant 0 : index
    %161 = vector.load %arg10[%c0_138, %c0_139] : memref<19x18xf32, #tpu.memory_space<vmem>>, vector<16x18xf32>
    %162 = vector.broadcast %28 : f32 to vector<16x18xf32>
    %163 = arith.mulf %162, %161 : vector<16x18xf32>
    %164 = arith.addf %160, %163 : vector<16x18xf32>
    %c0_140 = arith.constant 0 : index
    %c0_141 = arith.constant 0 : index
    %165 = vector.load %arg11[%c0_140, %c0_141] : memref<19x18xf32, #tpu.memory_space<vmem>>, vector<16x18xf32>
    %166 = vector.broadcast %30 : f32 to vector<16x18xf32>
    %167 = arith.mulf %166, %165 : vector<16x18xf32>
    %168 = arith.addf %164, %167 : vector<16x18xf32>
    %169 = vector.broadcast %33 : f32 to vector<16x18xf32>
    %170 = arith.addf %168, %169 : vector<16x18xf32>
    %cst_142 = arith.constant 0.000000e+00 : f32
    %171 = vector.broadcast %cst_142 : f32 to vector<16x18xf32>
    %172 = arith.cmpf oge, %170, %171 : vector<16x18xf32>
    %cst_143 = arith.constant 4.000000e-01 : f32
    %173 = vector.broadcast %cst_143 : f32 to vector<16x18xf32>
    %174 = arith.mulf %173, %170 : vector<16x18xf32>
    %175 = arith.select %172, %170, %174 : vector<16x18xi1>, vector<16x18xf32>
    %c0_144 = arith.constant 0 : index
    %c0_145 = arith.constant 0 : index
    %c0_146 = arith.constant 0 : index
    %176 = vector.load %arg6[%c0_144, %c0_145, %c0_146] : memref<1x16x18xf32, #tpu.memory_space<vmem>>, vector<1x16x18xf32>
    %177 = vector.shape_cast %176 : vector<1x16x18xf32> to vector<16x18xf32>
    %178 = vector.shape_cast %175 : vector<16x18xf32> to vector<1x16x18xf32>
    tpu.vector_store %arg6[%c0_144, %c0_145, %c0_146], %178 {strides = array<i32>} : memref<1x16x18xf32, #tpu.memory_space<vmem>>, vector<1x16x18xf32>,
    %cst_147 = arith.constant 0.000000e+00 : f32
    %179 = vector.broadcast %cst_147 : f32 to vector<16x18xf32>
    %c3_148 = arith.constant 3 : index
    %c0_149 = arith.constant 0 : index
    %180 = vector.load %arg10[%c3_148, %c0_149] : memref<19x18xf32, #tpu.memory_space<vmem>>, vector<16x18xf32>
    %181 = vector.broadcast %17 : f32 to vector<16x18xf32>
    %182 = arith.mulf %181, %180 : vector<16x18xf32>
    %183 = arith.addf %179, %182 : vector<16x18xf32>
    %c3_150 = arith.constant 3 : index
    %c0_151 = arith.constant 0 : index
    %184 = vector.load %arg11[%c3_150, %c0_151] : memref<19x18xf32, #tpu.memory_space<vmem>>, vector<16x18xf32>
    %185 = vector.broadcast %19 : f32 to vector<16x18xf32>
    %186 = arith.mulf %185, %184 : vector<16x18xf32>
    %187 = arith.addf %183, %186 : vector<16x18xf32>
    %c2_152 = arith.constant 2 : index
    %c0_153 = arith.constant 0 : index
    %188 = vector.load %arg10[%c2_152, %c0_153] : memref<19x18xf32, #tpu.memory_space<vmem>>, vector<16x18xf32>
    %189 = vector.broadcast %21 : f32 to vector<16x18xf32>
    %190 = arith.mulf %189, %188 : vector<16x18xf32>
    %191 = arith.addf %187, %190 : vector<16x18xf32>
    %c2_154 = arith.constant 2 : index
    %c0_155 = arith.constant 0 : index
    %192 = vector.load %arg11[%c2_154, %c0_155] : memref<19x18xf32, #tpu.memory_space<vmem>>, vector<16x18xf32>
    %193 = vector.broadcast %23 : f32 to vector<16x18xf32>
    %194 = arith.mulf %193, %192 : vector<16x18xf32>
    %195 = arith.addf %191, %194 : vector<16x18xf32>
    %c1_156 = arith.constant 1 : index
    %c0_157 = arith.constant 0 : index
    %196 = vector.load %arg10[%c1_156, %c0_157] : memref<19x18xf32, #tpu.memory_space<vmem>>, vector<16x18xf32>
    %197 = vector.broadcast %25 : f32 to vector<16x18xf32>
    %198 = arith.mulf %197, %196 : vector<16x18xf32>
    %199 = arith.addf %195, %198 : vector<16x18xf32>
    %c1_158 = arith.constant 1 : index
    %c0_159 = arith.constant 0 : index
    %200 = vector.load %arg11[%c1_158, %c0_159] : memref<19x18xf32, #tpu.memory_space<vmem>>, vector<16x18xf32>
    %201 = vector.broadcast %27 : f32 to vector<16x18xf32>
    %202 = arith.mulf %201, %200 : vector<16x18xf32>
    %203 = arith.addf %199, %202 : vector<16x18xf32>
    %c0_160 = arith.constant 0 : index
    %c0_161 = arith.constant 0 : index
    %204 = vector.load %arg10[%c0_160, %c0_161] : memref<19x18xf32, #tpu.memory_space<vmem>>, vector<16x18xf32>
    %205 = vector.broadcast %29 : f32 to vector<16x18xf32>
    %206 = arith.mulf %205, %204 : vector<16x18xf32>
    %207 = arith.addf %203, %206 : vector<16x18xf32>
    %c0_162 = arith.constant 0 : index
    %c0_163 = arith.constant 0 : index
    %208 = vector.load %arg11[%c0_162, %c0_163] : memref<19x18xf32, #tpu.memory_space<vmem>>, vector<16x18xf32>
    %209 = vector.broadcast %31 : f32 to vector<16x18xf32>
    %210 = arith.mulf %209, %208 : vector<16x18xf32>
    %211 = arith.addf %207, %210 : vector<16x18xf32>
    %212 = vector.broadcast %33 : f32 to vector<16x18xf32>
    %213 = arith.addf %211, %212 : vector<16x18xf32>
    %cst_164 = arith.constant 0.000000e+00 : f32
    %214 = vector.broadcast %cst_164 : f32 to vector<16x18xf32>
    %215 = arith.cmpf oge, %213, %214 : vector<16x18xf32>
    %cst_165 = arith.constant 4.000000e-01 : f32
    %216 = vector.broadcast %cst_165 : f32 to vector<16x18xf32>
    %217 = arith.mulf %216, %213 : vector<16x18xf32>
    %218 = arith.select %215, %213, %217 : vector<16x18xi1>, vector<16x18xf32>
    %c0_166 = arith.constant 0 : index
    %c0_167 = arith.constant 0 : index
    %c0_168 = arith.constant 0 : index
    %219 = vector.load %arg7[%c0_166, %c0_167, %c0_168] : memref<1x16x18xf32, #tpu.memory_space<vmem>>, vector<1x16x18xf32>
    %220 = vector.shape_cast %219 : vector<1x16x18xf32> to vector<16x18xf32>
    %221 = vector.shape_cast %218 : vector<16x18xf32> to vector<1x16x18xf32>
    tpu.vector_store %arg7[%c0_166, %c0_167, %c0_168], %221 {strides = array<i32>} : memref<1x16x18xf32, #tpu.memory_space<vmem>>, vector<1x16x18xf32>,
    %cst_169 = arith.constant 0.000000e+00 : f32
    %222 = vector.broadcast %cst_169 : f32 to vector<16x17xf32>
    %c3_170 = arith.constant 3 : index
    %c1_171 = arith.constant 1 : index
    %223 = vector.load %arg11[%c3_170, %c1_171] : memref<19x18xf32, #tpu.memory_space<vmem>>, vector<16x17xf32>
    %224 = vector.broadcast %16 : f32 to vector<16x17xf32>
    %225 = arith.mulf %224, %223 : vector<16x17xf32>
    %226 = arith.addf %222, %225 : vector<16x17xf32>
    %c3_172 = arith.constant 3 : index
    %c0_173 = arith.constant 0 : index
    %227 = vector.load %arg10[%c3_172, %c0_173] : memref<19x18xf32, #tpu.memory_space<vmem>>, vector<16x17xf32>
    %228 = vector.broadcast %18 : f32 to vector<16x17xf32>
    %229 = arith.mulf %228, %227 : vector<16x17xf32>
    %230 = arith.addf %226, %229 : vector<16x17xf32>
    %c2_174 = arith.constant 2 : index
    %c1_175 = arith.constant 1 : index
    %231 = vector.load %arg11[%c2_174, %c1_175] : memref<19x18xf32, #tpu.memory_space<vmem>>, vector<16x17xf32>
    %232 = vector.broadcast %20 : f32 to vector<16x17xf32>
    %233 = arith.mulf %232, %231 : vector<16x17xf32>
    %234 = arith.addf %230, %233 : vector<16x17xf32>
    %c2_176 = arith.constant 2 : index
    %c0_177 = arith.constant 0 : index
    %235 = vector.load %arg10[%c2_176, %c0_177] : memref<19x18xf32, #tpu.memory_space<vmem>>, vector<16x17xf32>
    %236 = vector.broadcast %22 : f32 to vector<16x17xf32>
    %237 = arith.mulf %236, %235 : vector<16x17xf32>
    %238 = arith.addf %234, %237 : vector<16x17xf32>
    %c1_178 = arith.constant 1 : index
    %c1_179 = arith.constant 1 : index
    %239 = vector.load %arg11[%c1_178, %c1_179] : memref<19x18xf32, #tpu.memory_space<vmem>>, vector<16x17xf32>
    %240 = vector.broadcast %24 : f32 to vector<16x17xf32>
    %241 = arith.mulf %240, %239 : vector<16x17xf32>
    %242 = arith.addf %238, %241 : vector<16x17xf32>
    %c1_180 = arith.constant 1 : index
    %c0_181 = arith.constant 0 : index
    %243 = vector.load %arg10[%c1_180, %c0_181] : memref<19x18xf32, #tpu.memory_space<vmem>>, vector<16x17xf32>
    %244 = vector.broadcast %26 : f32 to vector<16x17xf32>
    %245 = arith.mulf %244, %243 : vector<16x17xf32>
    %246 = arith.addf %242, %245 : vector<16x17xf32>
    %c0_182 = arith.constant 0 : index
    %c1_183 = arith.constant 1 : index
    %247 = vector.load %arg11[%c0_182, %c1_183] : memref<19x18xf32, #tpu.memory_space<vmem>>, vector<16x17xf32>
    %248 = vector.broadcast %28 : f32 to vector<16x17xf32>
    %249 = arith.mulf %248, %247 : vector<16x17xf32>
    %250 = arith.addf %246, %249 : vector<16x17xf32>
    %c0_184 = arith.constant 0 : index
    %c0_185 = arith.constant 0 : index
    %251 = vector.load %arg10[%c0_184, %c0_185] : memref<19x18xf32, #tpu.memory_space<vmem>>, vector<16x17xf32>
    %252 = vector.broadcast %30 : f32 to vector<16x17xf32>
    %253 = arith.mulf %252, %251 : vector<16x17xf32>
    %254 = arith.addf %250, %253 : vector<16x17xf32>
    %255 = vector.broadcast %33 : f32 to vector<16x17xf32>
    %256 = arith.addf %254, %255 : vector<16x17xf32>
    %cst_186 = arith.constant 0.000000e+00 : f32
    %257 = vector.broadcast %cst_186 : f32 to vector<16x17xf32>
    %258 = arith.cmpf oge, %256, %257 : vector<16x17xf32>
    %cst_187 = arith.constant 4.000000e-01 : f32
    %259 = vector.broadcast %cst_187 : f32 to vector<16x17xf32>
    %260 = arith.mulf %259, %256 : vector<16x17xf32>
    %261 = arith.select %258, %256, %260 : vector<16x17xi1>, vector<16x17xf32>
    %c0_188 = arith.constant 0 : index
    %c0_189 = arith.constant 0 : index
    %c0_190 = arith.constant 0 : index
    %262 = vector.load %arg8[%c0_188, %c0_189, %c0_190] : memref<1x16x17xf32, #tpu.memory_space<vmem>>, vector<1x16x17xf32>
    %263 = vector.shape_cast %262 : vector<1x16x17xf32> to vector<16x17xf32>
    %264 = vector.shape_cast %261 : vector<16x17xf32> to vector<1x16x17xf32>
    tpu.vector_store %arg8[%c0_188, %c0_189, %c0_190], %264 {strides = array<i32>} : memref<1x16x17xf32, #tpu.memory_space<vmem>>, vector<1x16x17xf32>,
    %cst_191 = arith.constant 0.000000e+00 : f32
    %265 = vector.broadcast %cst_191 : f32 to vector<16x17xf32>
    %c3_192 = arith.constant 3 : index
    %c1_193 = arith.constant 1 : index
    %266 = vector.load %arg11[%c3_192, %c1_193] : memref<19x18xf32, #tpu.memory_space<vmem>>, vector<16x17xf32>
    %267 = vector.broadcast %17 : f32 to vector<16x17xf32>
    %268 = arith.mulf %267, %266 : vector<16x17xf32>
    %269 = arith.addf %265, %268 : vector<16x17xf32>
    %c3_194 = arith.constant 3 : index
    %c0_195 = arith.constant 0 : index
    %270 = vector.load %arg10[%c3_194, %c0_195] : memref<19x18xf32, #tpu.memory_space<vmem>>, vector<16x17xf32>
    %271 = vector.broadcast %19 : f32 to vector<16x17xf32>
    %272 = arith.mulf %271, %270 : vector<16x17xf32>
    %273 = arith.addf %269, %272 : vector<16x17xf32>
    %c2_196 = arith.constant 2 : index
    %c1_197 = arith.constant 1 : index
    %274 = vector.load %arg11[%c2_196, %c1_197] : memref<19x18xf32, #tpu.memory_space<vmem>>, vector<16x17xf32>
    %275 = vector.broadcast %21 : f32 to vector<16x17xf32>
    %276 = arith.mulf %275, %274 : vector<16x17xf32>
    %277 = arith.addf %273, %276 : vector<16x17xf32>
    %c2_198 = arith.constant 2 : index
    %c0_199 = arith.constant 0 : index
    %278 = vector.load %arg10[%c2_198, %c0_199] : memref<19x18xf32, #tpu.memory_space<vmem>>, vector<16x17xf32>
    %279 = vector.broadcast %23 : f32 to vector<16x17xf32>
    %280 = arith.mulf %279, %278 : vector<16x17xf32>
    %281 = arith.addf %277, %280 : vector<16x17xf32>
    %c1_200 = arith.constant 1 : index
    %c1_201 = arith.constant 1 : index
    %282 = vector.load %arg11[%c1_200, %c1_201] : memref<19x18xf32, #tpu.memory_space<vmem>>, vector<16x17xf32>
    %283 = vector.broadcast %25 : f32 to vector<16x17xf32>
    %284 = arith.mulf %283, %282 : vector<16x17xf32>
    %285 = arith.addf %281, %284 : vector<16x17xf32>
    %c1_202 = arith.constant 1 : index
    %c0_203 = arith.constant 0 : index
    %286 = vector.load %arg10[%c1_202, %c0_203] : memref<19x18xf32, #tpu.memory_space<vmem>>, vector<16x17xf32>
    %287 = vector.broadcast %27 : f32 to vector<16x17xf32>
    %288 = arith.mulf %287, %286 : vector<16x17xf32>
    %289 = arith.addf %285, %288 : vector<16x17xf32>
    %c0_204 = arith.constant 0 : index
    %c1_205 = arith.constant 1 : index
    %290 = vector.load %arg11[%c0_204, %c1_205] : memref<19x18xf32, #tpu.memory_space<vmem>>, vector<16x17xf32>
    %291 = vector.broadcast %29 : f32 to vector<16x17xf32>
    %292 = arith.mulf %291, %290 : vector<16x17xf32>
    %293 = arith.addf %289, %292 : vector<16x17xf32>
    %c0_206 = arith.constant 0 : index
    %c0_207 = arith.constant 0 : index
    %294 = vector.load %arg10[%c0_206, %c0_207] : memref<19x18xf32, #tpu.memory_space<vmem>>, vector<16x17xf32>
    %295 = vector.broadcast %31 : f32 to vector<16x17xf32>
    %296 = arith.mulf %295, %294 : vector<16x17xf32>
    %297 = arith.addf %293, %296 : vector<16x17xf32>
    %298 = vector.broadcast %33 : f32 to vector<16x17xf32>
    %299 = arith.addf %297, %298 : vector<16x17xf32>
    %cst_208 = arith.constant 0.000000e+00 : f32
    %300 = vector.broadcast %cst_208 : f32 to vector<16x17xf32>
    %301 = arith.cmpf oge, %299, %300 : vector<16x17xf32>
    %cst_209 = arith.constant 4.000000e-01 : f32
    %302 = vector.broadcast %cst_209 : f32 to vector<16x17xf32>
    %303 = arith.mulf %302, %299 : vector<16x17xf32>
    %304 = arith.select %301, %299, %303 : vector<16x17xi1>, vector<16x17xf32>
    %c0_210 = arith.constant 0 : index
    %c0_211 = arith.constant 0 : index
    %c0_212 = arith.constant 0 : index
    %305 = vector.load %arg9[%c0_210, %c0_211, %c0_212] : memref<1x16x17xf32, #tpu.memory_space<vmem>>, vector<1x16x17xf32>
    %306 = vector.shape_cast %305 : vector<1x16x17xf32> to vector<16x17xf32>
    %307 = vector.shape_cast %304 : vector<16x17xf32> to vector<1x16x17xf32>
    tpu.vector_store %arg9[%c0_210, %c0_211, %c0_212], %307 {strides = array<i32>} : memref<1x16x17xf32, #tpu.memory_space<vmem>>, vector<1x16x17xf32>,
    return
  }
  func.func @transform_0(%arg0: i32) -> (i32, i32) {
    %c0_i32 = arith.constant 0 : i32
    %c0_i32_0 = arith.constant 0 : i32
    %c0_i32_1 = arith.constant 0 : i32
    return %c0_i32, %c0_i32_0 : i32, i32
  }
  func.func @transform_1(%arg0: i32) -> i32 {
    %c0_i32 = arith.constant 0 : i32
    %c0_i32_0 = arith.constant 0 : i32
    return %c0_i32 : i32
  }
  func.func @transform_2(%arg0: i32) -> (i32, i32) {
    %c0_i32 = arith.constant 0 : i32
    %c0_i32_0 = arith.constant 0 : i32
    %c0_i32_1 = arith.constant 0 : i32
    return %c0_i32, %c0_i32_0 : i32, i32
  }
  func.func @transform_3(%arg0: i32) -> i32 {
    %c0_i32 = arith.constant 0 : i32
    %c0_i32_0 = arith.constant 0 : i32
    return %c0_i32 : i32
  }
  func.func @transform_4(%arg0: i32) -> (i32, i32, i32) {
    %c0_i32 = arith.constant 0 : i32
    %c0_i32_0 = arith.constant 0 : i32
    %c0_i32_1 = arith.constant 0 : i32
    return %arg0, %c0_i32, %c0_i32_0 : i32, i32, i32
  }
  func.func @transform_5(%arg0: i32) -> (i32, i32, i32) {
    %c0_i32 = arith.constant 0 : i32
    %c0_i32_0 = arith.constant 0 : i32
    %c0_i32_1 = arith.constant 0 : i32
    return %arg0, %c0_i32, %c0_i32_0 : i32, i32, i32
  }
  func.func @transform_6(%arg0: i32) -> (i32, i32, i32) {
    %c0_i32 = arith.constant 0 : i32
    %c0_i32_0 = arith.constant 0 : i32
    %c0_i32_1 = arith.constant 0 : i32
    return %arg0, %c0_i32, %c0_i32_0 : i32, i32, i32
  }
  func.func @transform_7(%arg0: i32) -> (i32, i32, i32) {
    %c0_i32 = arith.constant 0 : i32
    %c0_i32_0 = arith.constant 0 : i32
    %c0_i32_1 = arith.constant 0 : i32
    return %arg0, %c0_i32, %c0_i32_0 : i32, i32, i32
  }
  func.func @transform_8(%arg0: i32) -> (i32, i32, i32) {
    %c0_i32 = arith.constant 0 : i32
    %c0_i32_0 = arith.constant 0 : i32
    %c0_i32_1 = arith.constant 0 : i32
    return %arg0, %c0_i32, %c0_i32_0 : i32, i32, i32
  }
}

</mosaic_0001>

<llo_original>
// kernel: tpu_custom_call.1
$region0: #{tpu_custom_call.1}
  #allocation0 [shape = 'u32[]', space=smem, size = 0x4, offset = 0x4, fixed_abs, tag = 'smem constant byte address 0x4 - core index']
  #allocation1 [shape = 'u32[144,128]{1,0:T(1,128)}', space=vmem, size = 0x12000, scoped, tag = 'internal scratch']
  #allocation2 [shape = 'f32[19,18]{1,0:T(8,128)}', space=vmem, size = 0x3000, scoped, tag = 'scratch operand']
  #allocation3 [shape = 'f32[19,18]{1,0:T(8,128)}', space=vmem, size = 0x3000, scoped, tag = 'scratch operand']
  #allocation4 [shape = 'f32[1]{0:T(128)S(6)}', space=smem, size = 0x200, scoped, tag = 'scoped memory for tpu_custom_call.1']
  #allocation5 [shape = 'f32[1]{0:T(128)S(6)}', space=smem, size = 0x200, scoped, tag = 'scoped memory for tpu_custom_call.1']
  %s0 = inlined_call_operand.vmem [shape: f32[4,4], index: 0, kind: input, shape index: {}]
  %s1 = inlined_call_operand.<no memory space> [shape: f32[1], index: 1, kind: input, shape index: {}]
  %s2 = inlined_call_operand.vmem [shape: f32[4,4], index: 2, kind: input, shape index: {}]
  %s3 = inlined_call_operand.<no memory space> [shape: f32[1], index: 3, kind: input, shape index: {}]
  %s4 = inlined_call_operand.vmem [shape: f32[2,14,18], index: 4, kind: input, shape index: {}]
  %s5 = inlined_call_operand.hbm [shape: f32[2,16,18], index: 5, kind: output, shape index: {0}]
  %s6 = inlined_call_operand.hbm [shape: f32[2,16,18], index: 6, kind: output, shape index: {1}]
  %s7 = inlined_call_operand.hbm [shape: f32[2,16,17], index: 7, kind: output, shape index: {2}]
  %s8 = inlined_call_operand.hbm [shape: f32[2,16,17], index: 8, kind: output, shape index: {3}]
  %9 = xla_tuple %s5, %s6, %s7, %s8
  %s10 = sld [smem:[#allocation0]]
  $region85: #{tpu_custom_call.1} parent=0
    _
  %s12 = ssub.s32 1, %s10
  %s13 = scalar_select 0, %s12, %s10
  %14 = sst [smem:[#allocation4]] %s1
  %15 = sst [smem:[#allocation5]] %s3
  $region1: #{tpu_custom_call.1} parent=0
    #allocation6 [shape = 'u8[2048]{0}', space=smem, size = 0x800, scoped, tag = 'input window, operand 0, single buffered']
    #allocation7 [shape = 's32[2]{0}', space=sflag, size = 0x8, scoped, tag = 'scoped memory for tpu_custom_call.1']
    #allocation8 [shape = 's32[2]{0}', space=sflag, size = 0x8, scoped, tag = 'scoped memory for tpu_custom_call.1']
    #allocation9 [shape = 'u8[2048]{0}', space=smem, size = 0x800, scoped, tag = 'input window, operand 2, single buffered']
    #allocation10 [shape = 's32[1]{0}', space=sflag, size = 0x4, scoped, tag = 'scoped memory for tpu_custom_call.1']
    #allocation11 [shape = 'u8[16384]{0}', space=vmem, size = 0x4000, scoped, tag = 'output window, operand 0']
    #allocation12 [shape = 'u8[16384]{0}', space=vmem, size = 0x4000, scoped, tag = 'output window, operand 1']
    #allocation13 [shape = 's32[2]{0}', space=sflag, size = 0x8, scoped, tag = 'scoped memory for tpu_custom_call.1']
    #allocation14 [shape = 'u8[16384]{0}', space=vmem, size = 0x4000, scoped, tag = 'output window, operand 2']
    #allocation15 [shape = 'u8[16384]{0}', space=vmem, size = 0x4000, scoped, tag = 'output window, operand 3']
    #allocation16 [shape = 's32[2]{0}', space=sflag, size = 0x8, scoped, tag = 'scoped memory for tpu_custom_call.1']
    %16 = vsyncpa [#allocation8], 0
    %17 = vsyncpa [#allocation10], 0
    %18 = vsyncpa [#allocation7], 0
    %s19 = scalar_lea.sflag [#allocation7], 1
    %20 = vsyncpa %s19, 0
    %21 = vsyncpa [#allocation13], 0
    %s22 = scalar_lea.sflag [#allocation13], 1
    %23 = vsyncpa %s22, 0
    %24 = vsyncpa [#allocation16], 0
    %s25 = scalar_lea.sflag [#allocation16], 1
    %26 = vsyncpa %s25, 0
    loop: start=0, step=1, limit=4
    $region2: #{tpu_custom_call.1} parent=1 // loop_pre_header
      _
    $region3: #{tpu_custom_call.1} parent=1 // loop_header
      %s28 = sphi 0, %s32
      %p29 = scmp.ge.s32.totalorder %s28, 4
      %s36 = sphi 0, %s36
      %s38 = sphi 0, %s36
      %s39 = sphi 0, %s38
      %s53 = sphi 0, %s39
      %s57 = sphi 0, %s57
      %s59 = sphi 0, %s57
      %s60 = sphi 0, %s59
      %s74 = sphi 0, %s60
      %s78 = sphi 0, %s78
      %s80 = sphi 0, %s78
      %s81 = sphi 0, %s80
      %s95 = sphi 0, %s81
      %s99 = sphi 0, %s99
      %s101 = sphi 0, %s99
      %s102 = sphi 0, %s101
      %s116 = sphi 0, %s102
      %s122 = sphi 0, %s124
      %s125 = sphi 0, %s122
      %s126 = sphi 0, %s125
      %s142 = sphi 0, %s126
      %s148 = sphi 0, %s150
      %s151 = sphi 0, %s148
      %s152 = sphi 0, %s151
      %s168 = sphi 0, %s152
      %s174 = sphi 0, %s176
      %s177 = sphi 0, %s174
      %s178 = sphi 0, %s177
      %s194 = sphi 0, %s178
      %s200 = sphi 0, %s202
      %s203 = sphi 0, %s200
      %s204 = sphi 0, %s203
      %s220 = sphi 0, %s204
      %s226 = sphi 0, %s228
      %s229 = sphi 0, %s226
      %s230 = sphi 0, %s229
      %s246 = sphi 0, %s230
    $region4: #{tpu_custom_call.1} parent=1 // loop_header_branch
      %31 = sbr.rel (%p29) target = $region8
    $region5: #{tpu_custom_call.1} parent=1 // loop_body
      %s33 = ssub.s32 %s28, 1
      %s34 = ssub.s32 %s28, 2
      %s35 = sadd.s32 %s28, 1
      %s37 = sadd.s32 %s36, 1
      %p40 = scmp.eq.s32.totalorder %s28, 1
      %p41 = scmp.ne.s32.totalorder %s36, %s38
      %p42 = scmp.eq.s32.totalorder %s28, 0
      %p43 = por %p41, %p42
      %p44 = scmp.ne.s32.totalorder %s36, %s38
      %p45 = scmp.eq.s32.totalorder %s33, 1
      %p46 = por %p44, %p45
      %p47 = scmp.ne.s32.totalorder %s38, %s39
      %p48 = scmp.eq.s32.totalorder %s33, 0
      %p49 = por %p47, %p48
      %p50 = scmp.ne.s32.totalorder %s38, %s39
      %p51 = scmp.eq.s32.totalorder %s34, 1
      %p52 = por %p50, %p51
      %p54 = scmp.ne.s32.totalorder %s39, %s53
      %p55 = scmp.eq.s32.totalorder %s34, 0
      %p56 = por %p54, %p55
      %s58 = sadd.s32 %s57, 1
      %p61 = scmp.eq.s32.totalorder %s28, 1
      %p62 = scmp.ne.s32.totalorder %s57, %s59
      %p63 = scmp.eq.s32.totalorder %s28, 0
      %p64 = por %p62, %p63
      %p65 = scmp.ne.s32.totalorder %s57, %s59
      %p66 = scmp.eq.s32.totalorder %s33, 1
      %p67 = por %p65, %p66
      %p68 = scmp.ne.s32.totalorder %s59, %s60
      %p69 = scmp.eq.s32.totalorder %s33, 0
      %p70 = por %p68, %p69
      %p71 = scmp.ne.s32.totalorder %s59, %s60
      %p72 = scmp.eq.s32.totalorder %s34, 1
      %p73 = por %p71, %p72
      %p75 = scmp.ne.s32.totalorder %s60, %s74
      %p76 = scmp.eq.s32.totalorder %s34, 0
      %p77 = por %p75, %p76
      %s79 = sadd.s32 %s78, 1
      %p82 = scmp.eq.s32.totalorder %s28, 1
      %p83 = scmp.ne.s32.totalorder %s78, %s80
      %p84 = scmp.eq.s32.totalorder %s28, 0
      %p85 = por %p83, %p84
      %p86 = scmp.ne.s32.totalorder %s78, %s80
      %p87 = scmp.eq.s32.totalorder %s33, 1
      %p88 = por %p86, %p87
      %p89 = scmp.ne.s32.totalorder %s80, %s81
      %p90 = scmp.eq.s32.totalorder %s33, 0
      %p91 = por %p89, %p90
      %p92 = scmp.ne.s32.totalorder %s80, %s81
      %p93 = scmp.eq.s32.totalorder %s34, 1
      %p94 = por %p92, %p93
      %p96 = scmp.ne.s32.totalorder %s81, %s95
      %p97 = scmp.eq.s32.totalorder %s34, 0
      %p98 = por %p96, %p97
      %s100 = sadd.s32 %s99, 1
      %p103 = scmp.eq.s32.totalorder %s28, 1
      %p104 = scmp.ne.s32.totalorder %s99, %s101
      %p105 = scmp.eq.s32.totalorder %s28, 0
      %p106 = por %p104, %p105
      %p107 = scmp.ne.s32.totalorder %s99, %s101
      %p108 = scmp.eq.s32.totalorder %s33, 1
      %p109 = por %p107, %p108
      %p110 = scmp.ne.s32.totalorder %s101, %s102
      %p111 = scmp.eq.s32.totalorder %s33, 0
      %p112 = por %p110, %p111
      %p113 = scmp.ne.s32.totalorder %s101, %s102
      %p114 = scmp.eq.s32.totalorder %s34, 1
      %p115 = por %p113, %p114
      %p117 = scmp.ne.s32.totalorder %s102, %s116
      %p118 = scmp.eq.s32.totalorder %s34, 0
      %p119 = por %p117, %p118
      %s120 = ssub.s32 %s28, %s35
      %p121 = scmp.eq.s32.totalorder %s120, 0
      %s123 = sadd.s32 %s122, 1
      %s124 = scalar_select %p121, %s122, %s123
      %p127 = pneg %p121
      %p128 = scmp.eq.s32.totalorder %s28, 1
      %p129 = por %p127, %p128
      %p130 = scmp.ne.s32.totalorder %s122, %s125
      %p131 = scmp.eq.s32.totalorder %s28, 0
      %p132 = por %p130, %p131
      %p133 = scmp.ne.s32.totalorder %s122, %s125
      %p134 = scmp.eq.s32.totalorder %s33, 1
      %p135 = por %p133, %p134
      %p136 = scmp.ne.s32.totalorder %s125, %s126
      %p137 = scmp.eq.s32.totalorder %s33, 0
      %p138 = por %p136, %p137
      %p139 = scmp.ne.s32.totalorder %s125, %s126
      %p140 = scmp.eq.s32.totalorder %s34, 1
      %p141 = por %p139, %p140
      %p143 = scmp.ne.s32.totalorder %s126, %s142
      %p144 = scmp.eq.s32.totalorder %s34, 0
      %p145 = por %p143, %p144
      %s146 = ssub.s32 %s28, %s35
      %p147 = scmp.eq.s32.totalorder %s146, 0
      %s149 = sadd.s32 %s148, 1
      %s150 = scalar_select %p147, %s148, %s149
      %p153 = pneg %p147
      %p154 = scmp.eq.s32.totalorder %s28, 1
      %p155 = por %p153, %p154
      %p156 = scmp.ne.s32.totalorder %s148, %s151
      %p157 = scmp.eq.s32.totalorder %s28, 0
      %p158 = por %p156, %p157
      %p159 = scmp.ne.s32.totalorder %s148, %s151
      %p160 = scmp.eq.s32.totalorder %s33, 1
      %p161 = por %p159, %p160
      %p162 = scmp.ne.s32.totalorder %s151, %s152
      %p163 = scmp.eq.s32.totalorder %s33, 0
      %p164 = por %p162, %p163
      %p165 = scmp.ne.s32.totalorder %s151, %s152
      %p166 = scmp.eq.s32.totalorder %s34, 1
      %p167 = por %p165, %p166
      %p169 = scmp.ne.s32.totalorder %s152, %s168
      %p170 = scmp.eq.s32.totalorder %s34, 0
      %p171 = por %p169, %p170
      %s172 = ssub.s32 %s28, %s35
      %p173 = scmp.eq.s32.totalorder %s172, 0
      %s175 = sadd.s32 %s174, 1
      %s176 = scalar_select %p173, %s174, %s175
      %p179 = pneg %p173
      %p180 = scmp.eq.s32.totalorder %s28, 1
      %p181 = por %p179, %p180
      %p182 = scmp.ne.s32.totalorder %s174, %s177
      %p183 = scmp.eq.s32.totalorder %s28, 0
      %p184 = por %p182, %p183
      %p185 = scmp.ne.s32.totalorder %s174, %s177
      %p186 = scmp.eq.s32.totalorder %s33, 1
      %p187 = por %p185, %p186
      %p188 = scmp.ne.s32.totalorder %s177, %s178
      %p189 = scmp.eq.s32.totalorder %s33, 0
      %p190 = por %p188, %p189
      %p191 = scmp.ne.s32.totalorder %s177, %s178
      %p192 = scmp.eq.s32.totalorder %s34, 1
      %p193 = por %p191, %p192
      %p195 = scmp.ne.s32.totalorder %s178, %s194
      %p196 = scmp.eq.s32.totalorder %s34, 0
      %p197 = por %p195, %p196
      %s198 = ssub.s32 %s28, %s35
      %p199 = scmp.eq.s32.totalorder %s198, 0
      %s201 = sadd.s32 %s200, 1
      %s202 = scalar_select %p199, %s200, %s201
      %p205 = pneg %p199
      %p206 = scmp.eq.s32.totalorder %s28, 1
      %p207 = por %p205, %p206
      %p208 = scmp.ne.s32.totalorder %s200, %s203
      %p209 = scmp.eq.s32.totalorder %s28, 0
      %p210 = por %p208, %p209
      %p211 = scmp.ne.s32.totalorder %s200, %s203
      %p212 = scmp.eq.s32.totalorder %s33, 1
      %p213 = por %p211, %p212
      %p214 = scmp.ne.s32.totalorder %s203, %s204
      %p215 = scmp.eq.s32.totalorder %s33, 0
      %p216 = por %p214, %p215
      %p217 = scmp.ne.s32.totalorder %s203, %s204
      %p218 = scmp.eq.s32.totalorder %s34, 1
      %p219 = por %p217, %p218
      %p221 = scmp.ne.s32.totalorder %s204, %s220
      %p222 = scmp.eq.s32.totalorder %s34, 0
      %p223 = por %p221, %p222
      %s224 = ssub.s32 %s28, %s35
      %p225 = scmp.eq.s32.totalorder %s224, 0
      %s227 = sadd.s32 %s226, 1
      %s228 = scalar_select %p225, %s226, %s227
      %p231 = pneg %p225
      %p232 = scmp.eq.s32.totalorder %s28, 1
      %p233 = por %p231, %p232
      %p234 = scmp.ne.s32.totalorder %s226, %s229
      %p235 = scmp.eq.s32.totalorder %s28, 0
      %p236 = por %p234, %p235
      %p237 = scmp.ne.s32.totalorder %s226, %s229
      %p238 = scmp.eq.s32.totalorder %s33, 1
      %p239 = por %p237, %p238
      %p240 = scmp.ne.s32.totalorder %s229, %s230
      %p241 = scmp.eq.s32.totalorder %s33, 0
      %p242 = por %p240, %p241
      %p243 = scmp.ne.s32.totalorder %s229, %s230
      %p244 = scmp.eq.s32.totalorder %s34, 1
      %p245 = por %p243, %p244
      %p247 = scmp.ne.s32.totalorder %s230, %s246
      %p248 = scmp.eq.s32.totalorder %s34, 0
      %p249 = por %p247, %p248
      %p250 = scmp.le.s32.totalorder 1, %s28
      %p251 = scmp.lt.s32.totalorder %s28, 3
      %p252 = pnand %p250, %p251
      %p253 = pneg %p252
      // Predicated region
      $region9: #{tpu_custom_call.1} parent=5 // pred_check
        _
      $region10: #{tpu_custom_call.1} parent=5 // pred_check_branch
        %255 = sbr.rel (%p252) target = $region12
      $region11: #{tpu_custom_call.1} parent=5 // pred_region
        %s256 = ssub.s32 %s28, 1
        // Predicated region
        $region13: #{tpu_custom_call.1} parent=11 // pred_check
          %p257 = pneg %p49
        $region14: #{tpu_custom_call.1} parent=11 // pred_check_branch
          %259 = sbr.rel (%p257) target = $region16
        $region15: #{tpu_custom_call.1} parent=11 // pred_region
          %s261 = ssub.s32 64, 64
          %262 = vsyncadd [#allocation8], %s261
          %s264 = sshll.u32 %s0, 4
          %s265 = int_to_ptr.vmem [resolvable:$true] %s264
          %267 = dma.vmem_to_smem %s265, 64, [#allocation6], [#allocation8]
        $region16: #{tpu_custom_call.1} parent=11 // pred_fallthru
          _
        // Predicated region
        $region17: #{tpu_custom_call.1} parent=11 // pred_check
          %p268 = pneg %p70
        $region18: #{tpu_custom_call.1} parent=11 // pred_check_branch
          %270 = sbr.rel (%p268) target = $region20
        $region19: #{tpu_custom_call.1} parent=11 // pred_region
          _
        $region20: #{tpu_custom_call.1} parent=11 // pred_fallthru
          _
        // Predicated region
        $region21: #{tpu_custom_call.1} parent=11 // pred_check
          %p271 = pneg %p91
        $region22: #{tpu_custom_call.1} parent=11 // pred_check_branch
          %273 = sbr.rel (%p271) target = $region24
        $region23: #{tpu_custom_call.1} parent=11 // pred_region
          %s275 = ssub.s32 64, 64
          %276 = vsyncadd [#allocation10], %s275
          %s278 = sshll.u32 %s2, 4
          %s279 = int_to_ptr.vmem [resolvable:$true] %s278
          %281 = dma.vmem_to_smem %s279, 64, [#allocation9], [#allocation10]
        $region24: #{tpu_custom_call.1} parent=11 // pred_fallthru
          _
        // Predicated region
        $region25: #{tpu_custom_call.1} parent=11 // pred_check
          %p282 = pneg %p112
        $region26: #{tpu_custom_call.1} parent=11 // pred_check_branch
          %284 = sbr.rel (%p282) target = $region28
        $region27: #{tpu_custom_call.1} parent=11 // pred_region
          _
        $region28: #{tpu_custom_call.1} parent=11 // pred_fallthru
          _
      $region12: #{tpu_custom_call.1} parent=5 // pred_fallthru
        _
      %p285 = scmp.lt.s32.totalorder %s28, 2
      // Predicated region
      $region29: #{tpu_custom_call.1} parent=5 // pred_check
        %p286 = pneg %p285
      $region30: #{tpu_custom_call.1} parent=5 // pred_check_branch
        %288 = sbr.rel (%p286) target = $region32
      $region31: #{tpu_custom_call.1} parent=5 // pred_region
        // Predicated region
        $region33: #{tpu_custom_call.1} parent=31 // pred_check
          %p289 = pneg %p132
        $region34: #{tpu_custom_call.1} parent=31 // pred_check_branch
          %291 = sbr.rel (%p289) target = $region36
        $region35: #{tpu_custom_call.1} parent=31 // pred_region
          %p292 = scmp.lt.s32.totalorder %s28, 1
          %s293 = scalar_select %p292, %s28, 1
          %s294 = smul.addr %s293, 2
          %s295 = smul.addr %s294, 8
          %s296 = scalar_lea.vmem %s4, %s295
        $region36: #{tpu_custom_call.1} parent=31 // pred_fallthru
          _
      $region32: #{tpu_custom_call.1} parent=5 // pred_fallthru
        _
      %p297 = scmp.le.s32.totalorder 1, %s28
      %p298 = scmp.lt.s32.totalorder %s28, 3
      %p299 = pnand %p297, %p298
      %p300 = pneg %p299
      // Predicated region
      $region37: #{tpu_custom_call.1} parent=5 // pred_check
        _
      $region38: #{tpu_custom_call.1} parent=5 // pred_check_branch
        %302 = sbr.rel (%p299) target = $region40
      $region39: #{tpu_custom_call.1} parent=5 // pred_region
        %s303 = ssub.s32 %s28, 1
        // Predicated region
        $region41: #{tpu_custom_call.1} parent=39 // pred_check
          %p304 = pneg %p49
        $region42: #{tpu_custom_call.1} parent=39 // pred_check_branch
          %306 = sbr.rel (%p304) target = $region44
        $region43: #{tpu_custom_call.1} parent=39 // pred_region
          %307 = dma.done [#allocation8], 64
        $region44: #{tpu_custom_call.1} parent=39 // pred_fallthru
          _
        // Predicated region
        $region45: #{tpu_custom_call.1} parent=39 // pred_check
          %p308 = pneg %p91
        $region46: #{tpu_custom_call.1} parent=39 // pred_check_branch
          %310 = sbr.rel (%p308) target = $region48
        $region47: #{tpu_custom_call.1} parent=39 // pred_region
          %311 = dma.done [#allocation10], 64
        $region48: #{tpu_custom_call.1} parent=39 // pred_fallthru
          _
        %312 = sfence
        %p313 = pneg %p49
        %p314 = pneg %p46
        %p315 = pneg %p70
        %p316 = pneg %p67
        %p317 = pneg %p91
        %p318 = pneg %p88
        %p319 = pneg %p112
        %p320 = pneg %p109
        %p321 = scmp.lt.s32.totalorder %s33, 1
        %s322 = scalar_select %p321, %s33, 1
        %s323 = smul.addr %s322, 2
        %s324 = smul.addr %s323, 8
        %s325 = scalar_lea.vmem %s4, %s324
        %p326 = pneg %p138
        %p327 = pneg %p135
        %p328 = pneg %p164
        %p329 = pneg %p161
        %s330 = sand.u32 %s151, 1
        %s331 = scalar_lea.sflag [#allocation7], %s330
        %s332 = sand.u32 %s151, 1
        %s333 = smul.addr %s332, 16
        %s334 = scalar_lea.vmem [#allocation11], %s333
        %p335 = pneg %p190
        %p336 = pneg %p187
        %s337 = sand.u32 %s33, 1
        %s338 = scalar_lea.sflag [#allocation13], %s337
        %s339 = sand.u32 %s177, 1
        %s340 = smul.addr %s339, 16
        %s341 = scalar_lea.vmem [#allocation12], %s340
        %p342 = pneg %p216
        %p343 = pneg %p213
        %s344 = sand.u32 %s33, 1
        %s345 = scalar_lea.sflag [#allocation13], %s344
        %s346 = sand.u32 %s203, 1
        %s347 = smul.addr %s346, 16
        %s348 = scalar_lea.vmem [#allocation14], %s347
        %p349 = pneg %p242
        %p350 = pneg %p239
        %s351 = sand.u32 %s229, 1
        %s352 = scalar_lea.sflag [#allocation16], %s351
        %s353 = sand.u32 %s229, 1
        %s354 = smul.addr %s353, 16
        %s355 = scalar_lea.vmem [#allocation15], %s354
        %p356 = scmp.lt.s32.totalorder %s33, 1
        %s357 = scalar_select %p356, %s33, 1
        %s358 = smul.addr %s357, 2
        %s359 = smul.addr %s358, 8
        %s360 = scalar_lea.vmem %s4, %s359
        %s361 = sld [smem:[#allocation6]]
        %s362 = sld [smem:[#allocation6 + $0x1]]
        %s363 = sld [smem:[#allocation6 + $0x2]]
        %s364 = sld [smem:[#allocation6 + $0x3]]
        %s365 = sld [smem:[#allocation6 + $0x80]]
        %s366 = sld [smem:[#allocation6 + $0x81]]
        %s367 = sld [smem:[#allocation6 + $0x82]]
        %s368 = sld [smem:[#allocation6 + $0x83]]
        %s369 = sld [smem:[#allocation6 + $0x100]]
        %s370 = sld [smem:[#allocation6 + $0x101]]
        %s371 = sld [smem:[#allocation6 + $0x102]]
        %s372 = sld [smem:[#allocation6 + $0x103]]
        %s373 = sld [smem:[#allocation6 + $0x180]]
        %s374 = sld [smem:[#allocation6 + $0x181]]
        %s375 = sld [smem:[#allocation6 + $0x182]]
        %s376 = sld [smem:[#allocation6 + $0x183]]
        %s377 = sld [smem:[#allocation9]]
        %s378 = sld [smem:[#allocation9 + $0x1]]
        %s379 = sld [smem:[#allocation9 + $0x2]]
        %s380 = sld [smem:[#allocation9 + $0x3]]
        %s381 = sld [smem:[#allocation9 + $0x80]]
        %s382 = sld [smem:[#allocation9 + $0x81]]
        %s383 = sld [smem:[#allocation9 + $0x82]]
        %s384 = sld [smem:[#allocation9 + $0x83]]
        %s385 = sld [smem:[#allocation9 + $0x100]]
        %s386 = sld [smem:[#allocation9 + $0x101]]
        %s387 = sld [smem:[#allocation9 + $0x102]]
        %s388 = sld [smem:[#allocation9 + $0x103]]
        %s389 = sld [smem:[#allocation9 + $0x180]]
        %s390 = sld [smem:[#allocation9 + $0x181]]
        %s391 = sld [smem:[#allocation9 + $0x182]]
        %s392 = sld [smem:[#allocation9 + $0x183]]
        %s393 = sld [smem:[#allocation4]]
        %s394 = sld [smem:[#allocation5]]
        %v395 = vld [vmem:[%s360 + $0x3] sm:$0xff]
        %v396 = vld [vmem:[%s360 + $0xb] sm:$0x7]
        %v397 = vstv %s361
        %v398 = vmul.f32 %v397, %v395
        %v399 = vmul.f32 %v397, %v396
        %v400 = vadd.f32 %v398, 0.0
        %v401 = vadd.f32 %v399, 0.0
        %v402 = vstv %s363
        %v403 = vmul.f32 %v402, %v395
        %v404 = vmul.f32 %v402, %v396
        %407 = vrot.lane.b32.xlu0 %v403, 1
        %v408 = vpop.permute.xlu0 %407
        %409 = vrot.lane.b32.xlu0 %v404, 1
        %v410 = vpop.permute.xlu0 %409
        %v413 = vadd.f32 %v400, %v408
        %v414 = vadd.f32 %v401, %v410
        %v415 = vld [vmem:[%s360 + $0x2] sm:$0xff]
        %v416 = vld [vmem:[%s360 + $0xa] sm:$0x7]
        %v417 = vstv %s365
        %v418 = vmul.f32 %v417, %v415
        %v419 = vmul.f32 %v417, %v416
        %v420 = vadd.f32 %v413, %v418
        %v421 = vadd.f32 %v414, %v419
        %v422 = vstv %s367
        %v423 = vmul.f32 %v422, %v415
        %v424 = vmul.f32 %v422, %v416
        %427 = vrot.lane.b32.xlu0 %v423, 1
        %v428 = vpop.permute.xlu0 %427
        %429 = vrot.lane.b32.xlu0 %v424, 1
        %v430 = vpop.permute.xlu0 %429
        %v433 = vadd.f32 %v420, %v428
        %v434 = vadd.f32 %v421, %v430
        %v435 = vld [vmem:[%s360 + $0x1] sm:$0xff]
        %v436 = vld [vmem:[%s360 + $0x9] sm:$0x7]
        %v437 = vstv %s369
        %v438 = vmul.f32 %v437, %v435
        %v439 = vmul.f32 %v437, %v436
        %v440 = vadd.f32 %v433, %v438
        %v441 = vadd.f32 %v434, %v439
        %v442 = vstv %s371
        %v443 = vmul.f32 %v442, %v435
        %v444 = vmul.f32 %v442, %v436
        %447 = vrot.lane.b32.xlu0 %v443, 1
        %v448 = vpop.permute.xlu0 %447
        %449 = vrot.lane.b32.xlu0 %v444, 1
        %v450 = vpop.permute.xlu0 %449
        %v453 = vadd.f32 %v440, %v448
        %v454 = vadd.f32 %v441, %v450
        %v455 = vld [vmem:[%s360] sm:$0xff]
        %v456 = vld [vmem:[%s360 + $0x8] sm:$0x7]
        %v457 = vstv %s373
        %v458 = vmul.f32 %v457, %v455
        %v459 = vmul.f32 %v457, %v456
        %v460 = vadd.f32 %v453, %v458
        %v461 = vadd.f32 %v454, %v459
        %v462 = vstv %s375
        %v463 = vmul.f32 %v462, %v455
        %v464 = vmul.f32 %v462, %v456
        %467 = vrot.lane.b32.xlu0 %v463, 1
        %v468 = vpop.permute.xlu0 %467
        %469 = vrot.lane.b32.xlu0 %v464, 1
        %v470 = vpop.permute.xlu0 %469
        %v473 = vadd.f32 %v460, %v468
        %v474 = vadd.f32 %v461, %v470
        %v475 = vstv %s393
        %v476 = vadd.f32 %v473, %v475
        %v477 = vadd.f32 %v474, %v475
        %vm478 = vcmp.ge.f32.partialorder %v476, 0.0
        %vm479 = vcmp.ge.f32.partialorder %v477, 0.0
        %v480 = vmul.f32 %v476, 0.4
        %v481 = vmul.f32 %v477, 0.4
        %v482 = vsel %vm478, %v476, %v480
        %v483 = vsel %vm479, %v477, %v481
        %vm484 = vcmask 146432
        %485 = vst.msk [vmem:[#allocation2] sm:$0xff] %vm484, 0.0
        %486 = vst.msk [vmem:[#allocation2 + $0x8] sm:$0xff] %vm484, 0.0
        %vm487 = vcmask 141312
        %488 = vst.msk [vmem:[#allocation2 + $0x10] sm:$0x7] %vm487, 0.0
        %491 = vrot.lane.b32.xlu0 %v482, 127
        %v492 = vpop.permute.xlu0 %491
        %493 = vrot.lane.b32.xlu0 %v483, 127
        %v494 = vpop.permute.xlu0 %493
        %vm497 = vcmask 138240
        %498 = vst.msk [vmem:[#allocation2 + $0x3] sm:$0xff] %vm497, %v492
        %vm499 = vcmask 133120
        %500 = vst.msk [vmem:[#allocation2 + $0xb] sm:$0x7] %vm499, %v494
        %v501 = vld [vmem:[%s360 + $0x3] sm:$0xff]
        %v502 = vld [vmem:[%s360 + $0xb] sm:$0x7]
        %v503 = vstv %s362
        %v504 = vmul.f32 %v503, %v501
        %v505 = vmul.f32 %v503, %v502
        %v506 = vadd.f32 %v504, 0.0
        %v507 = vadd.f32 %v505, 0.0
        %v508 = vstv %s364
        %v509 = vmul.f32 %v508, %v501
        %v510 = vmul.f32 %v508, %v502
        %513 = vrot.lane.b32.xlu0 %v509, 1
        %v514 = vpop.permute.xlu0 %513
        %515 = vrot.lane.b32.xlu0 %v510, 1
        %v516 = vpop.permute.xlu0 %515
        %v519 = vadd.f32 %v506, %v514
        %v520 = vadd.f32 %v507, %v516
        %v521 = vld [vmem:[%s360 + $0x2] sm:$0xff]
        %v522 = vld [vmem:[%s360 + $0xa] sm:$0x7]
        %v523 = vstv %s366
        %v524 = vmul.f32 %v523, %v521
        %v525 = vmul.f32 %v523, %v522
        %v526 = vadd.f32 %v519, %v524
        %v527 = vadd.f32 %v520, %v525
        %v528 = vstv %s368
        %v529 = vmul.f32 %v528, %v521
        %v530 = vmul.f32 %v528, %v522
        %533 = vrot.lane.b32.xlu0 %v529, 1
        %v534 = vpop.permute.xlu0 %533
        %535 = vrot.lane.b32.xlu0 %v530, 1
        %v536 = vpop.permute.xlu0 %535
        %v539 = vadd.f32 %v526, %v534
        %v540 = vadd.f32 %v527, %v536
        %v541 = vld [vmem:[%s360 + $0x1] sm:$0xff]
        %v542 = vld [vmem:[%s360 + $0x9] sm:$0x7]
        %v543 = vstv %s370
        %v544 = vmul.f32 %v543, %v541
        %v545 = vmul.f32 %v543, %v542
        %v546 = vadd.f32 %v539, %v544
        %v547 = vadd.f32 %v540, %v545
        %v548 = vstv %s372
        %v549 = vmul.f32 %v548, %v541
        %v550 = vmul.f32 %v548, %v542
        %553 = vrot.lane.b32.xlu0 %v549, 1
        %v554 = vpop.permute.xlu0 %553
        %555 = vrot.lane.b32.xlu0 %v550, 1
        %v556 = vpop.permute.xlu0 %555
        %v559 = vadd.f32 %v546, %v554
        %v560 = vadd.f32 %v547, %v556
        %v561 = vld [vmem:[%s360] sm:$0xff]
        %v562 = vld [vmem:[%s360 + $0x8] sm:$0x7]
        %v563 = vstv %s374
        %v564 = vmul.f32 %v563, %v561
        %v565 = vmul.f32 %v563, %v562
        %v566 = vadd.f32 %v559, %v564
        %v567 = vadd.f32 %v560, %v565
        %v568 = vstv %s376
        %v569 = vmul.f32 %v568, %v561
        %v570 = vmul.f32 %v568, %v562
        %573 = vrot.lane.b32.xlu0 %v569, 1
        %v574 = vpop.permute.xlu0 %573
        %575 = vrot.lane.b32.xlu0 %v570, 1
        %v576 = vpop.permute.xlu0 %575
        %v579 = vadd.f32 %v566, %v574
        %v580 = vadd.f32 %v567, %v576
        %v581 = vadd.f32 %v579, %v475
        %v582 = vadd.f32 %v580, %v475
        %vm583 = vcmp.ge.f32.partialorder %v581, 0.0
        %vm584 = vcmp.ge.f32.partialorder %v582, 0.0
        %v585 = vmul.f32 %v581, 0.4
        %v586 = vmul.f32 %v582, 0.4
        %v587 = vsel %vm583, %v581, %v585
        %v588 = vsel %vm584, %v582, %v586
        %589 = vst.msk [vmem:[#allocation3] sm:$0xff] %vm484, 0.0
        %590 = vst.msk [vmem:[#allocation3 + $0x8] sm:$0xff] %vm484, 0.0
        %591 = vst.msk [vmem:[#allocation3 + $0x10] sm:$0x7] %vm487, 0.0
        %vm592 = vcmask 146440
        %593 = vst.msk [vmem:[#allocation3 + $0x3] sm:$0xff] %vm592, %v587
        %vm594 = vcmask 141320
        %595 = vst.msk [vmem:[#allocation3 + $0xb] sm:$0x7] %vm594, %v588
        %v596 = vld [vmem:[#allocation2 + $0x3] sm:$0xff]
        %v597 = vld [vmem:[#allocation2 + $0xb] sm:$0xff]
        %v598 = vstv %s377
        %v599 = vmul.f32 %v598, %v596
        %v600 = vmul.f32 %v598, %v597
        %v601 = vadd.f32 %v599, 0.0
        %v602 = vadd.f32 %v600, 0.0
        %v603 = vld [vmem:[#allocation3 + $0x3] sm:$0xff]
        %v604 = vld [vmem:[#allocation3 + $0xb] sm:$0xff]
        %v605 = vstv %s379
        %v606 = vmul.f32 %v605, %v603
        %v607 = vmul.f32 %v605, %v604
        %v608 = vadd.f32 %v601, %v606
        %v609 = vadd.f32 %v602, %v607
        %v610 = vld [vmem:[#allocation2 + $0x2] sm:$0xff]
        %v611 = vld [vmem:[#allocation2 + $0xa] sm:$0xff]
        %v612 = vstv %s381
        %v613 = vmul.f32 %v612, %v610
        %v614 = vmul.f32 %v612, %v611
        %v615 = vadd.f32 %v608, %v613
        %v616 = vadd.f32 %v609, %v614
        %v617 = vld [vmem:[#allocation3 + $0x2] sm:$0xff]
        %v618 = vld [vmem:[#allocation3 + $0xa] sm:$0xff]
        %v619 = vstv %s383
        %v620 = vmul.f32 %v619, %v617
        %v621 = vmul.f32 %v619, %v618
        %v622 = vadd.f32 %v615, %v620
        %v623 = vadd.f32 %v616, %v621
        %v624 = vld [vmem:[#allocation2 + $0x1] sm:$0xff]
        %v625 = vld [vmem:[#allocation2 + $0x9] sm:$0xff]
        %v626 = vstv %s385
        %v627 = vmul.f32 %v626, %v624
        %v628 = vmul.f32 %v626, %v625
        %v629 = vadd.f32 %v622, %v627
        %v630 = vadd.f32 %v623, %v628
        %v631 = vld [vmem:[#allocation3 + $0x1] sm:$0xff]
        %v632 = vld [vmem:[#allocation3 + $0x9] sm:$0xff]
        %v633 = vstv %s387
        %v634 = vmul.f32 %v633, %v631
        %v635 = vmul.f32 %v633, %v632
        %v636 = vadd.f32 %v629, %v634
        %v637 = vadd.f32 %v630, %v635
        %v638 = vld [vmem:[#allocation2] sm:$0xff]
        %v639 = vld [vmem:[#allocation2 + $0x8] sm:$0xff]
        %v640 = vstv %s389
        %v641 = vmul.f32 %v640, %v638
        %v642 = vmul.f32 %v640, %v639
        %v643 = vadd.f32 %v636, %v641
        %v644 = vadd.f32 %v637, %v642
        %v645 = vld [vmem:[#allocation3] sm:$0xff]
        %v646 = vld [vmem:[#allocation3 + $0x8] sm:$0xff]
        %v647 = vstv %s391
        %v648 = vmul.f32 %v647, %v645
        %v649 = vmul.f32 %v647, %v646
        %v650 = vadd.f32 %v643, %v648
        %v651 = vadd.f32 %v644, %v649
        %v652 = vstv %s394
        %v653 = vadd.f32 %v650, %v652
        %v654 = vadd.f32 %v651, %v652
        %vm655 = vcmp.ge.f32.partialorder %v653, 0.0
        %vm656 = vcmp.ge.f32.partialorder %v654, 0.0
        %v657 = vmul.f32 %v653, 0.4
        %v658 = vmul.f32 %v654, 0.4
        %v659 = vsel %vm655, %v653, %v657
        %v660 = vsel %vm656, %v654, %v658
        %661 = vst.msk [vmem:[%s334] sm:$0xff] %vm484, %v659
        %662 = vst.msk [vmem:[%s334 + $0x8] sm:$0xff] %vm484, %v660
        %v663 = vld [vmem:[#allocation2 + $0x3] sm:$0xff]
        %v664 = vld [vmem:[#allocation2 + $0xb] sm:$0xff]
        %v665 = vstv %s378
        %v666 = vmul.f32 %v665, %v663
        %v667 = vmul.f32 %v665, %v664
        %v668 = vadd.f32 %v666, 0.0
        %v669 = vadd.f32 %v667, 0.0
        %v670 = vld [vmem:[#allocation3 + $0x3] sm:$0xff]
        %v671 = vld [vmem:[#allocation3 + $0xb] sm:$0xff]
        %v672 = vstv %s380
        %v673 = vmul.f32 %v672, %v670
        %v674 = vmul.f32 %v672, %v671
        %v675 = vadd.f32 %v668, %v673
        %v676 = vadd.f32 %v669, %v674
        %v677 = vld [vmem:[#allocation2 + $0x2] sm:$0xff]
        %v678 = vld [vmem:[#allocation2 + $0xa] sm:$0xff]
        %v679 = vstv %s382
        %v680 = vmul.f32 %v679, %v677
        %v681 = vmul.f32 %v679, %v678
        %v682 = vadd.f32 %v675, %v680
        %v683 = vadd.f32 %v676, %v681
        %v684 = vld [vmem:[#allocation3 + $0x2] sm:$0xff]
        %v685 = vld [vmem:[#allocation3 + $0xa] sm:$0xff]
        %v686 = vstv %s384
        %v687 = vmul.f32 %v686, %v684
        %v688 = vmul.f32 %v686, %v685
        %v689 = vadd.f32 %v682, %v687
        %v690 = vadd.f32 %v683, %v688
        %v691 = vld [vmem:[#allocation2 + $0x1] sm:$0xff]
        %v692 = vld [vmem:[#allocation2 + $0x9] sm:$0xff]
        %v693 = vstv %s386
        %v694 = vmul.f32 %v693, %v691
        %v695 = vmul.f32 %v693, %v692
        %v696 = vadd.f32 %v689, %v694
        %v697 = vadd.f32 %v690, %v695
        %v698 = vld [vmem:[#allocation3 + $0x1] sm:$0xff]
        %v699 = vld [vmem:[#allocation3 + $0x9] sm:$0xff]
        %v700 = vstv %s388
        %v701 = vmul.f32 %v700, %v698
        %v702 = vmul.f32 %v700, %v699
        %v703 = vadd.f32 %v696, %v701
        %v704 = vadd.f32 %v697, %v702
        %v705 = vld [vmem:[#allocation2] sm:$0xff]
        %v706 = vld [vmem:[#allocation2 + $0x8] sm:$0xff]
        %v707 = vstv %s390
        %v708 = vmul.f32 %v707, %v705
        %v709 = vmul.f32 %v707, %v706
        %v710 = vadd.f32 %v703, %v708
        %v711 = vadd.f32 %v704, %v709
        %v712 = vld [vmem:[#allocation3] sm:$0xff]
        %v713 = vld [vmem:[#allocation3 + $0x8] sm:$0xff]
        %v714 = vstv %s392
        %v715 = vmul.f32 %v714, %v712
        %v716 = vmul.f32 %v714, %v713
        %v717 = vadd.f32 %v710, %v715
        %v718 = vadd.f32 %v711, %v716
        %v719 = vadd.f32 %v717, %v652
        %v720 = vadd.f32 %v718, %v652
        %vm721 = vcmp.ge.f32.partialorder %v719, 0.0
        %vm722 = vcmp.ge.f32.partialorder %v720, 0.0
        %v723 = vmul.f32 %v719, 0.4
        %v724 = vmul.f32 %v720, 0.4
        %v725 = vsel %vm721, %v719, %v723
        %v726 = vsel %vm722, %v720, %v724
        %727 = vst.msk [vmem:[%s341] sm:$0xff] %vm484, %v725
        %728 = vst.msk [vmem:[%s341 + $0x8] sm:$0xff] %vm484, %v726
        %v729 = vld [vmem:[#allocation3 + $0x3] sm:$0xff]
        %v730 = vld [vmem:[#allocation3 + $0xb] sm:$0xff]
        %v731 = vmul.f32 %v598, %v729
        %v732 = vmul.f32 %v598, %v730
        %v733 = vadd.f32 %v731, 0.0
        %v734 = vadd.f32 %v732, 0.0
        %v735 = vld [vmem:[#allocation2 + $0x3] sm:$0xff]
        %v736 = vld [vmem:[#allocation2 + $0xb] sm:$0xff]
        %v737 = vmul.f32 %v605, %v735
        %v738 = vmul.f32 %v605, %v736
        %741 = vrot.lane.b32.xlu0 %v737, 1
        %v742 = vpop.permute.xlu0 %741
        %743 = vrot.lane.b32.xlu0 %v738, 1
        %v744 = vpop.permute.xlu0 %743
        %v747 = vadd.f32 %v733, %v742
        %v748 = vadd.f32 %v734, %v744
        %v749 = vld [vmem:[#allocation3 + $0x2] sm:$0xff]
        %v750 = vld [vmem:[#allocation3 + $0xa] sm:$0xff]
        %v751 = vmul.f32 %v612, %v749
        %v752 = vmul.f32 %v612, %v750
        %v753 = vadd.f32 %v747, %v751
        %v754 = vadd.f32 %v748, %v752
        %v755 = vld [vmem:[#allocation2 + $0x2] sm:$0xff]
        %v756 = vld [vmem:[#allocation2 + $0xa] sm:$0xff]
        %v757 = vmul.f32 %v619, %v755
        %v758 = vmul.f32 %v619, %v756
        %761 = vrot.lane.b32.xlu0 %v757, 1
        %v762 = vpop.permute.xlu0 %761
        %763 = vrot.lane.b32.xlu0 %v758, 1
        %v764 = vpop.permute.xlu0 %763
        %v767 = vadd.f32 %v753, %v762
        %v768 = vadd.f32 %v754, %v764
        %v769 = vld [vmem:[#allocation3 + $0x1] sm:$0xff]
        %v770 = vld [vmem:[#allocation3 + $0x9] sm:$0xff]
        %v771 = vmul.f32 %v626, %v769
        %v772 = vmul.f32 %v626, %v770
        %v773 = vadd.f32 %v767, %v771
        %v774 = vadd.f32 %v768, %v772
        %v775 = vld [vmem:[#allocation2 + $0x1] sm:$0xff]
        %v776 = vld [vmem:[#allocation2 + $0x9] sm:$0xff]
        %v777 = vmul.f32 %v633, %v775
        %v778 = vmul.f32 %v633, %v776
        %781 = vrot.lane.b32.xlu0 %v777, 1
        %v782 = vpop.permute.xlu0 %781
        %783 = vrot.lane.b32.xlu0 %v778, 1
        %v784 = vpop.permute.xlu0 %783
        %v787 = vadd.f32 %v773, %v782
        %v788 = vadd.f32 %v774, %v784
        %v789 = vld [vmem:[#allocation3] sm:$0xff]
        %v790 = vld [vmem:[#allocation3 + $0x8] sm:$0xff]
        %v791 = vmul.f32 %v640, %v789
        %v792 = vmul.f32 %v640, %v790
        %v793 = vadd.f32 %v787, %v791
        %v794 = vadd.f32 %v788, %v792
        %v795 = vld [vmem:[#allocation2] sm:$0xff]
        %v796 = vld [vmem:[#allocation2 + $0x8] sm:$0xff]
        %v797 = vmul.f32 %v647, %v795
        %v798 = vmul.f32 %v647, %v796
        %801 = vrot.lane.b32.xlu0 %v797, 1
        %v802 = vpop.permute.xlu0 %801
        %803 = vrot.lane.b32.xlu0 %v798, 1
        %v804 = vpop.permute.xlu0 %803
        %v807 = vadd.f32 %v793, %v802
        %v808 = vadd.f32 %v794, %v804
        %v809 = vadd.f32 %v807, %v652
        %v810 = vadd.f32 %v808, %v652
        %vm811 = vcmp.ge.f32.partialorder %v809, 0.0
        %vm812 = vcmp.ge.f32.partialorder %v810, 0.0
        %v813 = vmul.f32 %v809, 0.4
        %v814 = vmul.f32 %v810, 0.4
        %v815 = vsel %vm811, %v809, %v813
        %v816 = vsel %vm812, %v810, %v814
        %819 = vrot.lane.b32.xlu0 %v815, 127
        %v820 = vpop.permute.xlu0 %819
        %821 = vrot.lane.b32.xlu0 %v816, 127
        %v822 = vpop.permute.xlu0 %821
        %825 = vst.msk [vmem:[%s348] sm:$0xff] %vm497, %v820
        %826 = vst.msk [vmem:[%s348 + $0x8] sm:$0xff] %vm497, %v822
        %v827 = vld [vmem:[#allocation3 + $0x3] sm:$0xff]
        %v828 = vld [vmem:[#allocation3 + $0xb] sm:$0xff]
        %v829 = vmul.f32 %v665, %v827
        %v830 = vmul.f32 %v665, %v828
        %v831 = vadd.f32 %v829, 0.0
        %v832 = vadd.f32 %v830, 0.0
        %v833 = vld [vmem:[#allocation2 + $0x3] sm:$0xff]
        %v834 = vld [vmem:[#allocation2 + $0xb] sm:$0xff]
        %v835 = vmul.f32 %v672, %v833
        %v836 = vmul.f32 %v672, %v834
        %839 = vrot.lane.b32.xlu0 %v835, 1
        %v840 = vpop.permute.xlu0 %839
        %841 = vrot.lane.b32.xlu0 %v836, 1
        %v842 = vpop.permute.xlu0 %841
        %v845 = vadd.f32 %v831, %v840
        %v846 = vadd.f32 %v832, %v842
        %v847 = vld [vmem:[#allocation3 + $0x2] sm:$0xff]
        %v848 = vld [vmem:[#allocation3 + $0xa] sm:$0xff]
        %v849 = vmul.f32 %v679, %v847
        %v850 = vmul.f32 %v679, %v848
        %v851 = vadd.f32 %v845, %v849
        %v852 = vadd.f32 %v846, %v850
        %v853 = vld [vmem:[#allocation2 + $0x2] sm:$0xff]
        %v854 = vld [vmem:[#allocation2 + $0xa] sm:$0xff]
        %v855 = vmul.f32 %v686, %v853
        %v856 = vmul.f32 %v686, %v854
        %859 = vrot.lane.b32.xlu0 %v855, 1
        %v860 = vpop.permute.xlu0 %859
        %861 = vrot.lane.b32.xlu0 %v856, 1
        %v862 = vpop.permute.xlu0 %861
        %v865 = vadd.f32 %v851, %v860
        %v866 = vadd.f32 %v852, %v862
        %v867 = vld [vmem:[#allocation3 + $0x1] sm:$0xff]
        %v868 = vld [vmem:[#allocation3 + $0x9] sm:$0xff]
        %v869 = vmul.f32 %v693, %v867
        %v870 = vmul.f32 %v693, %v868
        %v871 = vadd.f32 %v865, %v869
        %v872 = vadd.f32 %v866, %v870
        %v873 = vld [vmem:[#allocation2 + $0x1] sm:$0xff]
        %v874 = vld [vmem:[#allocation2 + $0x9] sm:$0xff]
        %v875 = vmul.f32 %v700, %v873
        %v876 = vmul.f32 %v700, %v874
        %879 = vrot.lane.b32.xlu0 %v875, 1
        %v880 = vpop.permute.xlu0 %879
        %881 = vrot.lane.b32.xlu0 %v876, 1
        %v882 = vpop.permute.xlu0 %881
        %v885 = vadd.f32 %v871, %v880
        %v886 = vadd.f32 %v872, %v882
        %v887 = vld [vmem:[#allocation3] sm:$0xff]
        %v888 = vld [vmem:[#allocation3 + $0x8] sm:$0xff]
        %v889 = vmul.f32 %v707, %v887
        %v890 = vmul.f32 %v707, %v888
        %v891 = vadd.f32 %v885, %v889
        %v892 = vadd.f32 %v886, %v890
        %v893 = vld [vmem:[#allocation2] sm:$0xff]
        %v894 = vld [vmem:[#allocation2 + $0x8] sm:$0xff]
        %v895 = vmul.f32 %v714, %v893
        %v896 = vmul.f32 %v714, %v894
        %899 = vrot.lane.b32.xlu0 %v895, 1
        %v900 = vpop.permute.xlu0 %899
        %901 = vrot.lane.b32.xlu0 %v896, 1
        %v902 = vpop.permute.xlu0 %901
        %v905 = vadd.f32 %v891, %v900
        %v906 = vadd.f32 %v892, %v902
        %v907 = vadd.f32 %v905, %v652
        %v908 = vadd.f32 %v906, %v652
        %vm909 = vcmp.ge.f32.partialorder %v907, 0.0
        %vm910 = vcmp.ge.f32.partialorder %v908, 0.0
        %v911 = vmul.f32 %v907, 0.4
        %v912 = vmul.f32 %v908, 0.4
        %v913 = vsel %vm909, %v907, %v911
        %v914 = vsel %vm910, %v908, %v912
        %917 = vrot.lane.b32.xlu0 %v913, 127
        %v918 = vpop.permute.xlu0 %917
        %919 = vrot.lane.b32.xlu0 %v914, 127
        %v920 = vpop.permute.xlu0 %919
        %923 = vst.msk [vmem:[%s355] sm:$0xff] %vm497, %v918
        %924 = vst.msk [vmem:[%s355 + $0x8] sm:$0xff] %vm497, %v920
        %s925 = sand.u32 %s151, 1
        %s926 = scalar_lea.sflag [#allocation7], %s925
        %s927 = sand.u32 %s151, 1
        %s928 = smul.addr %s927, 16
        %s929 = scalar_lea.vmem [#allocation11], %s928
        %s930 = sand.u32 %s33, 1
        %s931 = scalar_lea.sflag [#allocation13], %s930
        %s932 = sand.u32 %s177, 1
        %s933 = smul.addr %s932, 16
        %s934 = scalar_lea.vmem [#allocation12], %s933
        %s935 = sand.u32 %s33, 1
        %s936 = scalar_lea.sflag [#allocation13], %s935
        %s937 = sand.u32 %s203, 1
        %s938 = smul.addr %s937, 16
        %s939 = scalar_lea.vmem [#allocation14], %s938
        %s940 = sand.u32 %s229, 1
        %s941 = scalar_lea.sflag [#allocation16], %s940
        %s942 = sand.u32 %s229, 1
        %s943 = smul.addr %s942, 16
        %s944 = scalar_lea.vmem [#allocation15], %s943
        // Predicated region
        $region49: #{tpu_custom_call.1} parent=39 // pred_check
          %p945 = pneg %p161
        $region50: #{tpu_custom_call.1} parent=39 // pred_check_branch
          %947 = sbr.rel (%p945) target = $region52
        $region51: #{tpu_custom_call.1} parent=39 // pred_region
          %s949 = ssub.s32 256, 256
          %950 = vsyncadd %s926, %s949
          %s951 = smul.addr %s33, 2
          %s952 = smul.addr %s951, 128
          %s953 = scalar_lea.hbm %s5, %s952
          %s954 = sshll.u32 %s929, 4
          %s955 = int_to_ptr.vmem [resolvable:$true] %s954
          %960 = dma.vmem_to_hbm [thread:$0]  %s955, 256, %s953, %s926, 128, 128, 8
        $region52: #{tpu_custom_call.1} parent=39 // pred_fallthru
          _
        // Predicated region
        $region53: #{tpu_custom_call.1} parent=39 // pred_check
          %p961 = pneg %p187
        $region54: #{tpu_custom_call.1} parent=39 // pred_check_branch
          %963 = sbr.rel (%p961) target = $region56
        $region55: #{tpu_custom_call.1} parent=39 // pred_region
          %s965 = ssub.s32 256, 256
          %966 = vsyncadd %s931, %s965
          %s967 = smul.addr %s33, 2
          %s968 = smul.addr %s967, 128
          %s969 = scalar_lea.hbm %s6, %s968
          %s970 = sshll.u32 %s934, 4
          %s971 = int_to_ptr.vmem [resolvable:$true] %s970
          %976 = dma.vmem_to_hbm [thread:$0]  %s971, 256, %s969, %s931, 128, 128, 8
        $region56: #{tpu_custom_call.1} parent=39 // pred_fallthru
          _
        // Predicated region
        $region57: #{tpu_custom_call.1} parent=39 // pred_check
          %p977 = pneg %p213
        $region58: #{tpu_custom_call.1} parent=39 // pred_check_branch
          %979 = sbr.rel (%p977) target = $region60
        $region59: #{tpu_custom_call.1} parent=39 // pred_region
          %s981 = ssub.s32 256, 256
          %982 = vsyncadd %s936, %s981
          %s983 = smul.addr %s33, 2
          %s984 = smul.addr %s983, 128
          %s985 = scalar_lea.hbm %s7, %s984
          %s986 = sshll.u32 %s939, 4
          %s987 = int_to_ptr.vmem [resolvable:$true] %s986
          %992 = dma.vmem_to_hbm [thread:$0]  %s987, 256, %s985, %s936, 128, 128, 8
        $region60: #{tpu_custom_call.1} parent=39 // pred_fallthru
          _
        // Predicated region
        $region61: #{tpu_custom_call.1} parent=39 // pred_check
          %p993 = pneg %p239
        $region62: #{tpu_custom_call.1} parent=39 // pred_check_branch
          %995 = sbr.rel (%p993) target = $region64
        $region63: #{tpu_custom_call.1} parent=39 // pred_region
          %s997 = ssub.s32 256, 256
          %998 = vsyncadd %s941, %s997
          %s999 = smul.addr %s33, 2
          %s1000 = smul.addr %s999, 128
          %s1001 = scalar_lea.hbm %s8, %s1000
          %s1002 = sshll.u32 %s944, 4
          %s1003 = int_to_ptr.vmem [resolvable:$true] %s1002
          %1008 = dma.vmem_to_hbm [thread:$0]  %s1003, 256, %s1001, %s941, 128, 128, 8
        $region64: #{tpu_custom_call.1} parent=39 // pred_fallthru
          _
      $region40: #{tpu_custom_call.1} parent=5 // pred_fallthru
        _
      %p1009 = scmp.le.s32.totalorder 2, %s28
      // Predicated region
      $region65: #{tpu_custom_call.1} parent=5 // pred_check
        %p1010 = pneg %p1009
      $region66: #{tpu_custom_call.1} parent=5 // pred_check_branch
        %1012 = sbr.rel (%p1010) target = $region68
      $region67: #{tpu_custom_call.1} parent=5 // pred_region
        %s1013 = ssub.s32 %s28, 2
        // Predicated region
        $region69: #{tpu_custom_call.1} parent=67 // pred_check
          %p1014 = pneg %p167
        $region70: #{tpu_custom_call.1} parent=67 // pred_check_branch
          %1016 = sbr.rel (%p1014) target = $region72
        $region71: #{tpu_custom_call.1} parent=67 // pred_region
          %s1017 = sand.u32 %s152, 1
          %s1018 = scalar_lea.sflag [#allocation7], %s1017
          %s1019 = sand.u32 %s152, 1
          %s1020 = smul.addr %s1019, 16
          %s1021 = scalar_lea.vmem [#allocation11], %s1020
          %1022 = dma.done %s1018, 256
        $region72: #{tpu_custom_call.1} parent=67 // pred_fallthru
          _
        // Predicated region
        $region73: #{tpu_custom_call.1} parent=67 // pred_check
          %p1023 = pneg %p193
        $region74: #{tpu_custom_call.1} parent=67 // pred_check_branch
          %1025 = sbr.rel (%p1023) target = $region76
        $region75: #{tpu_custom_call.1} parent=67 // pred_region
          %s1026 = sand.u32 %s34, 1
          %s1027 = scalar_lea.sflag [#allocation13], %s1026
          %s1028 = sand.u32 %s178, 1
          %s1029 = smul.addr %s1028, 16
          %s1030 = scalar_lea.vmem [#allocation12], %s1029
          %1031 = dma.done %s1027, 256
        $region76: #{tpu_custom_call.1} parent=67 // pred_fallthru
          _
        // Predicated region
        $region77: #{tpu_custom_call.1} parent=67 // pred_check
          %p1032 = pneg %p219
        $region78: #{tpu_custom_call.1} parent=67 // pred_check_branch
          %1034 = sbr.rel (%p1032) target = $region80
        $region79: #{tpu_custom_call.1} parent=67 // pred_region
          %s1035 = sand.u32 %s34, 1
          %s1036 = scalar_lea.sflag [#allocation13], %s1035
          %s1037 = sand.u32 %s204, 1
          %s1038 = smul.addr %s1037, 16
          %s1039 = scalar_lea.vmem [#allocation14], %s1038
          %1040 = dma.done %s1036, 256
        $region80: #{tpu_custom_call.1} parent=67 // pred_fallthru
          _
        // Predicated region
        $region81: #{tpu_custom_call.1} parent=67 // pred_check
          %p1041 = pneg %p245
        $region82: #{tpu_custom_call.1} parent=67 // pred_check_branch
          %1043 = sbr.rel (%p1041) target = $region84
        $region83: #{tpu_custom_call.1} parent=67 // pred_region
          %s1044 = sand.u32 %s230, 1
          %s1045 = scalar_lea.sflag [#allocation16], %s1044
          %s1046 = sand.u32 %s230, 1
          %s1047 = smul.addr %s1046, 16
          %s1048 = scalar_lea.vmem [#allocation15], %s1047
          %1049 = dma.done %s1045, 256
        $region84: #{tpu_custom_call.1} parent=67 // pred_fallthru
          _
      $region68: #{tpu_custom_call.1} parent=5 // pred_fallthru
        _
    $region6: #{tpu_custom_call.1} parent=1 // loop_footer
      %s32 = sadd.s32 1, %s28
    $region7: #{tpu_custom_call.1} parent=1 // loop_footer_branch
      %27 = sbr.rel target = $region3
    $region8: #{tpu_custom_call.1} parent=1 // loop_exit
      _
    %1050 = vsyncpa [#allocation7], 1
    %s1051 = scalar_lea.sflag [#allocation7], 1
    %1052 = vsyncpa %s1051, 1
    %1053 = vsyncpa [#allocation13], 1
    %s1054 = scalar_lea.sflag [#allocation13], 1
    %1055 = vsyncpa %s1054, 1
    %1056 = vsyncpa [#allocation16], 1
    %s1057 = scalar_lea.sflag [#allocation16], 1
    %1058 = vsyncpa %s1057, 1
    %1059 = vsyncpa [#allocation8], 1
    %s1060 = scalar_lea.sflag [#allocation8], 1
    %1061 = vsyncpa %s1060, 1
    %1062 = vsyncpa [#allocation10], 1

</llo_original>
